<compile_context>
chip_gen: v5e
topology: v5e:2x2
jax: 0.10.0
libtpu: 0.0.40
codegen_flags: <defaults>
</compile_context>

<pallas_src>
import jax
import jax.numpy as jnp
from jax.experimental import pallas as pl
from jax.experimental.pallas import tpu as pltpu


_BUFFERED = getattr(pl, "Buffered", None)


# ------------------------------ small helpers ------------------------------- #

def _round_down(x, m):
    return (x // m) * m


def _round_up(x, m):
    return ((x + m - 1) // m) * m


def _pick_b_tile(batch, cap):
    """Largest divisor of `batch` that is a multiple of 8 and <= cap; else full batch."""
    if batch % 8 != 0:
        return batch                      # full-extent block is always legal
    best = 8
    d = 8
    while d <= min(batch, cap):
        if batch % d == 0:
            best = d
        d += 8
    return best


def _tpu_info():
    """(vmem_capacity_bytes, lowercase chip name) with conservative fallbacks."""
    cap = None
    name = ""
    try:
        info = pltpu.get_tpu_info()
        cap = int(getattr(info, "vmem_capacity_bytes", 0)) or None
        for attr in ("chip_version", "chip_name", "name"):
            v = getattr(info, attr, None)
            if v is not None:
                name += str(v).lower()
    except Exception:
        pass
    if cap is None:
        cap = 64 * 1024 * 1024            # conservative (v7x-sized) fallback
    return cap, name


def _const_spec(shape, single_buffer):
    """Spec for a resident (constant index_map) weight block. Buffered(1) avoids
    allocating the unused second pipeline buffer for these never-refetched blocks."""
    idx_map = lambda b, k, _nd=len(shape): (0,) * _nd
    if single_buffer and _BUFFERED is not None:
        try:
            return pl.BlockSpec(shape, idx_map, pipeline_mode=_BUFFERED(1))
        except TypeError:
            pass
    return pl.BlockSpec(shape, idx_map)


# ----------------------------- Pallas kernel ------------------------------- #

def _make_kernel(num_inputs, t_total, fuse_matmul, mask_tail):
    """Fused kernel over refs laid out as:
       x_0..x_{n-1}, (w1_i, b1_i, w2_i)*n, b2_all(SMEM), out, acc_0..acc_{n-1}."""
    n = num_inputs
    inv_t = 1.0 / float(t_total)

    def kernel(*refs):
        x_refs = refs[:n]
        prm = refs[n:4 * n]              # interleaved (w1, b1, w2) per branch
        b2_ref = refs[4 * n]             # SMEM (n,) f32
        out_ref = refs[4 * n + 1]        # (b_tile, n) f32
        acc_refs = refs[4 * n + 2:]      # n x VMEM f32 accumulators

        k = pl.program_id(1)
        nk = pl.num_programs(1)
        t_tile = x_refs[0].shape[1]

        @pl.when(k == 0)
        def _init():
            for acc in acc_refs:
                acc[...] = jnp.zeros_like(acc)

        # Hot loop: pure HBM streaming of the features with f32 accumulation.
        for i in range(n):
            x = x_refs[i][...].astype(jnp.float32)           # (Bt, Tt, D_i)
            if mask_tail:
                # Mask rows of the (possibly partial) last T tile.
                rows = jax.lax.broadcasted_iota(jnp.int32, x.shape, 1)
                x = jnp.where(k * t_tile + rows < t_total, x, 0.0)
            part = jnp.sum(x, axis=1)                        # (Bt, D_i) f32
            if fuse_matmul:
                # Fold the W1 matmul into the hot loop: accumulator is (Bt, H).
                # MXU is idle in this HBM-bound kernel, so this is ~free and it
                # shrinks scratch VMEM from sum(D_i) to n*H columns (v7x win).
                w1 = prm[3 * i][...]
                acc_refs[i][...] += jnp.dot(part.astype(w1.dtype), w1,
                                            preferred_element_type=jnp.float32)
            else:
                acc_refs[i][...] += part

        @pl.when(k == nk - 1)
        def _finalize():
            col = jax.lax.broadcasted_iota(jnp.int32, out_ref.shape, 1)
            z = jnp.zeros(out_ref.shape, jnp.float32)
            for i in range(n):
                b1 = prm[3 * i + 1][...].astype(jnp.float32)   # (1, H)
                w2 = prm[3 * i + 2][...].astype(jnp.float32)   # (1, H) row layout
                if fuse_matmul:
                    h = acc_refs[i][...] * inv_t + b1          # mean@W1 == (sum@W1)/T
                else:
                    w1 = prm[3 * i][...]                       # (D_i, H)
                    m = acc_refs[i][...] * inv_t               # single /T in finalize
                    h = jnp.dot(m.astype(w1.dtype), w1,
                                preferred_element_type=jnp.float32) + b1
                h = jnp.maximum(h, 0.0)                        # ReLU
                # Dropout(p=0.1) is identity at inference time.
                # H -> 1 projection on the VPU/XLU (no N=1 MXU matmul):
                logit = jnp.sum(h * w2, axis=-1, keepdims=True) + b2_ref[i]
                z = z + jnp.where(col == i, logit, 0.0)        # lane-resident logits
            # softmax over num_inputs, in-kernel (no HBM round trip)
            z = z - jnp.max(z, axis=-1, keepdims=True)
            e = jnp.exp(z)
            out_ref[...] = (e / jnp.sum(e, axis=-1, keepdims=True)).astype(out_ref.dtype)

    return kernel


# ------------------------------ JAX wrapper --------------------------------- #

def weight_learner_forward(fea_lst, params, *, x_budget_bytes=None, fuse_matmul=None):
    """fea_lst[i]: (B, T, D_i). params[i]: (w1 (D_i,H), b1 (1,H), w2 (1,H), b2 ())."""
    num_inputs = len(fea_lst)
    assert len(params) == num_inputs
    B, T, _ = fea_lst[0].shape
    for x in fea_lst:
        assert x.shape[0] == B and x.shape[1] == T
    d_list = [int(x.shape[2]) for x in fea_lst]
    sum_d = sum(d_list)
    H = int(params[0][0].shape[1])
    for (w1, b1, w2, _b2), d in zip(params, d_list):
        assert w1.shape == (d, H) and b1.shape == (1, H) and w2.shape == (1, H)
    x_itemsize = jnp.dtype(fea_lst[0].dtype).itemsize
    w_itemsize = jnp.dtype(params[0][0].dtype).itemsize

    # --- per-generation VMEM budget (leave headroom for Mosaic internal scratch) ---
    vmem_cap, chip = _tpu_info()
    small_vmem = vmem_cap < (96 << 20)                    # v7x-like (64 MiB / TC)
    if small_vmem:
        vmem_limit = min(52 << 20, (vmem_cap * 13) // 16)
    else:                                                 # v5e / v6e (128 MiB / TC)
        vmem_limit = min(100 << 20, (vmem_cap * 13) // 16)

    # sublane packing multiple for the streamed dtype: f32 -> 8, bf16 -> 16, 8-bit -> 32
    t_mult = max(8, 32 // x_itemsize)

    # --- B tile: cap 256 (128 on v5e); guarantee >= 2 tiles on v7x for megacore ---
    b_cap = 128 if "5" in chip else 256
    b_tile = _pick_b_tile(B, b_cap)
    if small_vmem and B // b_tile < 2 and b_tile % 16 == 0:
        b_tile //= 2                                      # give both v7x TCs a B tile

    # --- fused-matmul heuristic: only when accumulator VMEM is the binding constraint
    if fuse_matmul is None:
        fuse_matmul = small_vmem and (sum_d > 2 * num_inputs * H)

    # --- resident-weight footprint (conservatively assume 2 pipeline buffers) ---
    H_pad = _round_up(H, 128)
    resident_w = 2 * sum(_round_up(d, 16) * H_pad * w_itemsize + 2 * 8 * H_pad * 4
                         for d in d_list)

    # --- jointly pick (b_tile, t_tile) so the streamed-x blocks fit the VMEM limit ---
    t_tile = T
    x_blk = fixed = 0
    for _ in range(8):
        b_pad = max(8, _round_up(b_tile, 8))
        if fuse_matmul:
            acc_bytes = num_inputs * b_pad * H_pad * 4
        else:
            acc_bytes = sum(b_pad * _round_up(d, 128) * 4 for d in d_list)
        out_bytes = 2 * b_pad * 128 * 4
        fixed = resident_w + acc_bytes + out_bytes + (2 << 20)   # + misc slack
        budget = (x_budget_bytes if x_budget_bytes is not None
                  else max(4 << 20, vmem_limit - fixed))
        per_row = 2 * b_tile * sum_d * x_itemsize                # double-buffered x / T-row
        if T <= t_mult:
            t_tile = T                                           # full extent (always legal)
        else:
            t_tile = max(t_mult, min(_round_down(T, t_mult),
                                     _round_down(max(budget // per_row, 1), t_mult)))
        x_blk = 2 * b_tile * t_tile * sum_d * x_itemsize
        if x_blk + fixed <= vmem_limit or b_tile <= 8 or b_tile % 16 != 0:
            break
        b_tile //= 2                                             # shrink B tile, retry

    n_b = B // b_tile
    n_t = (T + t_tile - 1) // t_tile
    mask_tail = (T % t_tile) != 0

    est = x_blk + fixed
    vmem_request = int(max(32 << 20, min(vmem_limit, (est * 5) // 4)))

    kernel = _make_kernel(num_inputs, T, fuse_matmul, mask_tail)

    # --- scratch accumulators ---
    if fuse_matmul:
        scratch_shapes = [pltpu.VMEM((b_tile, H), jnp.float32) for _ in d_list]
    else:
        scratch_shapes = [pltpu.VMEM((b_tile, d), jnp.float32) for d in d_list]

    # --- cost estimate ---
    mm_steps = n_t if fuse_matmul else 1
    flops = sum(2 * B * T * d + 2 * B * d * H * mm_steps + 4 * B * H for d in d_list)
    bytes_accessed = (sum(B * T * d * x_itemsize for d in d_list)
                      + sum(d * H * w_itemsize for d in d_list)
                      + B * num_inputs * 4)
    cost = pl.CostEstimate(flops=int(flops),
                           transcendentals=int(B * num_inputs),
                           bytes_accessed=int(bytes_accessed))

    # --- args: features, then (w1, b1, w2) per branch, then stacked b2 in SMEM ---
    args = list(fea_lst)
    for (w1, b1, w2, _b2) in params:
        args += [w1, b1, w2]
    b2_all = jnp.stack([jnp.asarray(p[3], jnp.float32).reshape(()) for p in params])
    args.append(b2_all)

    def _run(single_buffer_weights):
        in_specs = []
        for d in d_list:
            in_specs.append(pl.BlockSpec((b_tile, t_tile, d), lambda b, k: (b, k, 0)))
        for d in d_list:
            in_specs.append(_const_spec((d, H), single_buffer_weights))   # w1 (resident)
            in_specs.append(_const_spec((1, H), single_buffer_weights))   # b1
            in_specs.append(_const_spec((1, H), single_buffer_weights))   # w2 row
        in_specs.append(pl.BlockSpec(memory_space=pltpu.MemorySpace.SMEM))  # b2 (n,)

        return pl.pallas_call(
            kernel,
            out_shape=jax.ShapeDtypeStruct((B, num_inputs), jnp.float32),
            grid_spec=pltpu.PrefetchScalarGridSpec(
                num_scalar_prefetch=0,
                grid=(n_b, n_t),
                in_specs=in_specs,
                out_specs=pl.BlockSpec((b_tile, num_inputs), lambda b, k: (b, 0)),
                scratch_shapes=scratch_shapes,
            ),
            compiler_params=pltpu.CompilerParams(
                dimension_semantics=("parallel", "arbitrary"),
                vmem_limit_bytes=vmem_request,
            ),
            cost_estimate=cost,
        )(*args)

    try:
        return _run(single_buffer_weights=True)
    except Exception:
        # pipeline_mode / single-buffered resident weights unsupported: fall back.
        return _run(single_buffer_weights=False)


# --------------------------- params & reference ----------------------------- #

def init_params(key, input_size, hidden_size, num_inputs):
    """PyTorch nn.Linear default init: U(-1/sqrt(fan_in), 1/sqrt(fan_in)).
       w2 is stored as a (1, H) row (the H->1 projection is a reduction in-kernel)."""
    params = []
    for i in range(num_inputs):
        inp = input_size if i < num_inputs - 1 else input_size * 2
        key, k1, k2, k3, k4 = jax.random.split(key, 5)
        lim1 = float(inp) ** -0.5
        lim2 = float(hidden_size) ** -0.5
        w1 = jax.random.uniform(k1, (inp, hidden_size), jnp.float32, -lim1, lim1)
        b1 = jax.random.uniform(k2, (1, hidden_size), jnp.float32, -lim1, lim1)
        w2 = jax.random.uniform(k3, (1, hidden_size), jnp.float32, -lim2, lim2)
        b2 = jax.random.uniform(k4, (), jnp.float32, -lim2, lim2)
        params.append((w1, b1, w2, b2))
    return params


def reference_forward(fea_lst, params, *, cast_mean_to_weight_dtype=True):
    """Pure-JAX reference with the same dtype handling as the (non-fused) kernel."""
    t = fea_lst[0].shape[1]
    logits = []
    for x, (w1, b1, w2, b2) in zip(fea_lst, params):
        m = jnp.sum(x.astype(jnp.float32), axis=1) / t
        if cast_mean_to_weight_dtype:
            m = m.astype(w1.dtype)
        h = jnp.dot(m, w1, preferred_element_type=jnp.float32) + b1.astype(jnp.float32)
        h = jnp.maximum(h, 0.0)
        logits.append(jnp.sum(h * w2.astype(jnp.float32), axis=-1, keepdims=True)
                      + jnp.asarray(b2, jnp.float32))
    z = jnp.concatenate(logits, axis=-1)
    return jax.nn.softmax(z, axis=-1)


# ----------------------------------- main ----------------------------------- #

if __name__ == "__main__":
    # Small shapes consistent with the module (scaled down from 1024/512).
    input_size, hidden_size, num_inputs = 32, 16, 3
    stream_dtype = jnp.bfloat16   # stream features + W1 as bf16; accumulate in f32

    key = jax.random.PRNGKey(0)
    key, kp = jax.random.split(key)
    params = init_params(kp, input_size, hidden_size, num_inputs)
    params_stream = [(w1.astype(stream_dtype), b1, w2, b2) for (w1, b1, w2, b2) in params]

    def make_features(key, batch, seq):
        fea = []
        for i in range(num_inputs):
            d = input_size if i < num_inputs - 1 else input_size * 2
            key, kx = jax.random.split(key)
            fea.append(jax.random.normal(kx, (batch, seq, d), jnp.float32).astype(stream_dtype))
        return key, fea

    # 1) Default (D-column accumulator) path.
    key, fea = make_features(key, 2, 8)
    out = jax.block_until_ready(weight_learner_forward(fea, params_stream, fuse_matmul=False))
    ref = reference_forward(fea, params_stream)
    assert out.shape == (2, num_inputs)
    assert jnp.allclose(jnp.sum(out, axis=-1), 1.0, atol=1e-5)
    assert jnp.allclose(out, ref, atol=2e-3, rtol=2e-3)

    # 2) Fused-matmul (H-column accumulator) path, same shapes.
    out_f = jax.block_until_ready(weight_learner_forward(fea, params_stream, fuse_matmul=True))
    assert jnp.allclose(out_f, ref, atol=1e-2, rtol=1e-2)

    # 3) T not a multiple of the bf16 sublane tile (exercises the masked tail T tile
    #    and multi-step T accumulation) with a multiple-of-8 batch.
    key, fea3 = make_features(key, 8, 24)
    ref3 = reference_forward(fea3, params_stream)
    out3 = jax.block_until_ready(weight_learner_forward(fea3, params_stream, fuse_matmul=False))
    assert out3.shape == (8, num_inputs)
    assert jnp.allclose(jnp.sum(out3, axis=-1), 1.0, atol=1e-5)
    assert jnp.allclose(out3, ref3, atol=2e-3, rtol=2e-3)
    out3f = jax.block_until_ready(weight_learner_forward(fea3, params_stream, fuse_matmul=True))
    assert jnp.allclose(out3f, ref3, atol=1e-2, rtol=1e-2)

    # TODO(synk): training-mode Dropout(p=0.1) (PRNG mask) is not implemented;
    # this kernel matches eval/inference semantics.
    print("KERNEL_OK")
</pallas_src>

<mosaic_0001>
module attributes {stable_mosaic.version = 11 : i64} {
  func.func @kernel(%arg0: i32, %arg1: i32, %arg2: memref<2x8x32xbf16, #tpu.memory_space<vmem>>, %arg3: memref<2x8x32xbf16, #tpu.memory_space<vmem>>, %arg4: memref<2x8x64xbf16, #tpu.memory_space<vmem>>, %arg5: memref<32x16xbf16, #tpu.memory_space<vmem>>, %arg6: memref<1x16xf32, #tpu.memory_space<vmem>>, %arg7: memref<1x16xf32, #tpu.memory_space<vmem>>, %arg8: memref<32x16xbf16, #tpu.memory_space<vmem>>, %arg9: memref<1x16xf32, #tpu.memory_space<vmem>>, %arg10: memref<1x16xf32, #tpu.memory_space<vmem>>, %arg11: memref<64x16xbf16, #tpu.memory_space<vmem>>, %arg12: memref<1x16xf32, #tpu.memory_space<vmem>>, %arg13: memref<1x16xf32, #tpu.memory_space<vmem>>, %arg14: memref<3xf32, #tpu.memory_space<smem>>, %arg15: memref<2x3xf32, #tpu.memory_space<vmem>>, %arg16: memref<2x32xf32, #tpu.memory_space<vmem>>, %arg17: memref<2x32xf32, #tpu.memory_space<vmem>>, %arg18: memref<2x64xf32, #tpu.memory_space<vmem>>) attributes {dimension_semantics = [#tpu.dimension_semantics<parallel>, #tpu.dimension_semantics<arbitrary>], iteration_bounds = array<i64: 1, 1>, scalar_prefetch = 0 : i64, scratch_operands = 3 : i64, tpu.core_type = #tpu.core_type<tc>, window_params = [{transform_indices = @transform_0, window_bounds = array<i64: 2, 8, 32>}, {transform_indices = @transform_1, window_bounds = array<i64: 2, 8, 32>}, {transform_indices = @transform_2, window_bounds = array<i64: 2, 8, 64>}, {pipeline_mode = #tpu.pipeline_mode<synchronous>, transform_indices = @transform_3, window_bounds = array<i64: 32, 16>}, {pipeline_mode = #tpu.pipeline_mode<synchronous>, transform_indices = @transform_4, window_bounds = array<i64: 1, 16>}, {pipeline_mode = #tpu.pipeline_mode<synchronous>, transform_indices = @transform_5, window_bounds = array<i64: 1, 16>}, {pipeline_mode = #tpu.pipeline_mode<synchronous>, transform_indices = @transform_6, window_bounds = array<i64: 32, 16>}, {pipeline_mode = #tpu.pipeline_mode<synchronous>, transform_indices = @transform_7, window_bounds = array<i64: 1, 16>}, {pipeline_mode = #tpu.pipeline_mode<synchronous>, transform_indices = @transform_8, window_bounds = array<i64: 1, 16>}, {pipeline_mode = #tpu.pipeline_mode<synchronous>, transform_indices = @transform_9, window_bounds = array<i64: 64, 16>}, {pipeline_mode = #tpu.pipeline_mode<synchronous>, transform_indices = @transform_10, window_bounds = array<i64: 1, 16>}, {pipeline_mode = #tpu.pipeline_mode<synchronous>, transform_indices = @transform_11, window_bounds = array<i64: 1, 16>}, {transform_indices = @transform_12, window_bounds = array<i64: 3>}, {transform_indices = @transform_13, window_bounds = array<i64: 2, 3>}]} {
    %c0_i32 = arith.constant 0 : i32
    %0 = arith.cmpi eq, %arg1, %c0_i32 : i32
    %1 = arith.extui %0 : i1 to i32
    %c0_i32_0 = arith.constant 0 : i32
    %2 = arith.cmpi ne, %1, %c0_i32_0 : i32
    scf.if %2 {
      %cst_25 = arith.constant 0.000000e+00 : f32
      %24 = vector.broadcast %cst_25 : f32 to vector<2x32xf32>
      %c0_26 = arith.constant 0 : index
      %c0_27 = arith.constant 0 : index
      %25 = vector.load %arg16[%c0_26, %c0_27] : memref<2x32xf32, #tpu.memory_space<vmem>>, vector<2x32xf32>
      tpu.vector_store %arg16[%c0_26, %c0_27], %24 {strides = array<i32>} : memref<2x32xf32, #tpu.memory_space<vmem>>, vector<2x32xf32>,
      %cst_28 = arith.constant 0.000000e+00 : f32
      %26 = vector.broadcast %cst_28 : f32 to vector<2x32xf32>
      %c0_29 = arith.constant 0 : index
      %c0_30 = arith.constant 0 : index
      %27 = vector.load %arg17[%c0_29, %c0_30] : memref<2x32xf32, #tpu.memory_space<vmem>>, vector<2x32xf32>
      tpu.vector_store %arg17[%c0_29, %c0_30], %26 {strides = array<i32>} : memref<2x32xf32, #tpu.memory_space<vmem>>, vector<2x32xf32>,
      %cst_31 = arith.constant 0.000000e+00 : f32
      %28 = vector.broadcast %cst_31 : f32 to vector<2x64xf32>
      %c0_32 = arith.constant 0 : index
      %c0_33 = arith.constant 0 : index
      %29 = vector.load %arg18[%c0_32, %c0_33] : memref<2x64xf32, #tpu.memory_space<vmem>>, vector<2x64xf32>
      tpu.vector_store %arg18[%c0_32, %c0_33], %28 {strides = array<i32>} : memref<2x64xf32, #tpu.memory_space<vmem>>, vector<2x64xf32>,
    } else {
    }
    %c0 = arith.constant 0 : index
    %c0_1 = arith.constant 0 : index
    %c0_2 = arith.constant 0 : index
    %3 = vector.load %arg2[%c0, %c0_1, %c0_2] : memref<2x8x32xbf16, #tpu.memory_space<vmem>>, vector<2x8x32xbf16>
    %4 = arith.extf %3 : vector<2x8x32xbf16> to vector<2x8x32xf32>
    %cst = arith.constant dense<0.000000e+00> : vector<2x32xf32>
    %5 = vector.multi_reduction <add>, %4, %cst [1] : vector<2x8x32xf32> to vector<2x32xf32>
    %c0_3 = arith.constant 0 : index
    %c0_4 = arith.constant 0 : index
    %6 = vector.load %arg16[%c0_3, %c0_4] : memref<2x32xf32, #tpu.memory_space<vmem>>, vector<2x32xf32>
    %7 = arith.addf %6, %5 : vector<2x32xf32>
    %c0_5 = arith.constant 0 : index
    %c0_6 = arith.constant 0 : index
    %8 = vector.load %arg16[%c0_5, %c0_6] : memref<2x32xf32, #tpu.memory_space<vmem>>, vector<2x32xf32>
    tpu.vector_store %arg16[%c0_5, %c0_6], %7 {strides = array<i32>} : memref<2x32xf32, #tpu.memory_space<vmem>>, vector<2x32xf32>,
    %c0_7 = arith.constant 0 : index
    %c0_8 = arith.constant 0 : index
    %c0_9 = arith.constant 0 : index
    %9 = vector.load %arg3[%c0_7, %c0_8, %c0_9] : memref<2x8x32xbf16, #tpu.memory_space<vmem>>, vector<2x8x32xbf16>
    %10 = arith.extf %9 : vector<2x8x32xbf16> to vector<2x8x32xf32>
    %cst_10 = arith.constant dense<0.000000e+00> : vector<2x32xf32>
    %11 = vector.multi_reduction <add>, %10, %cst_10 [1] : vector<2x8x32xf32> to vector<2x32xf32>
    %c0_11 = arith.constant 0 : index
    %c0_12 = arith.constant 0 : index
    %12 = vector.load %arg17[%c0_11, %c0_12] : memref<2x32xf32, #tpu.memory_space<vmem>>, vector<2x32xf32>
    %13 = arith.addf %12, %11 : vector<2x32xf32>
    %c0_13 = arith.constant 0 : index
    %c0_14 = arith.constant 0 : index
    %14 = vector.load %arg17[%c0_13, %c0_14] : memref<2x32xf32, #tpu.memory_space<vmem>>, vector<2x32xf32>
    tpu.vector_store %arg17[%c0_13, %c0_14], %13 {strides = array<i32>} : memref<2x32xf32, #tpu.memory_space<vmem>>, vector<2x32xf32>,
    %c0_15 = arith.constant 0 : index
    %c0_16 = arith.constant 0 : index
    %c0_17 = arith.constant 0 : index
    %15 = vector.load %arg4[%c0_15, %c0_16, %c0_17] : memref<2x8x64xbf16, #tpu.memory_space<vmem>>, vector<2x8x64xbf16>
    %16 = arith.extf %15 : vector<2x8x64xbf16> to vector<2x8x64xf32>
    %cst_18 = arith.constant dense<0.000000e+00> : vector<2x64xf32>
    %17 = vector.multi_reduction <add>, %16, %cst_18 [1] : vector<2x8x64xf32> to vector<2x64xf32>
    %c0_19 = arith.constant 0 : index
    %c0_20 = arith.constant 0 : index
    %18 = vector.load %arg18[%c0_19, %c0_20] : memref<2x64xf32, #tpu.memory_space<vmem>>, vector<2x64xf32>
    %19 = arith.addf %18, %17 : vector<2x64xf32>
    %c0_21 = arith.constant 0 : index
    %c0_22 = arith.constant 0 : index
    %20 = vector.load %arg18[%c0_21, %c0_22] : memref<2x64xf32, #tpu.memory_space<vmem>>, vector<2x64xf32>
    tpu.vector_store %arg18[%c0_21, %c0_22], %19 {strides = array<i32>} : memref<2x64xf32, #tpu.memory_space<vmem>>, vector<2x64xf32>,
    %c0_i32_23 = arith.constant 0 : i32
    %21 = arith.cmpi eq, %arg1, %c0_i32_23 : i32
    %22 = arith.extui %21 : i1 to i32
    %c0_i32_24 = arith.constant 0 : i32
    %23 = arith.cmpi ne, %22, %c0_i32_24 : i32
    scf.if %23 {
      %24 = tpu.iota {dimensions = array<i32: 1>} : vector<2x3xi32>
      %cst_25 = arith.constant 0.000000e+00 : f32
      %25 = vector.broadcast %cst_25 : f32 to vector<2x3xf32>
      %c0_26 = arith.constant 0 : index
      %c0_27 = arith.constant 0 : index
      %26 = vector.load %arg6[%c0_26, %c0_27] : memref<1x16xf32, #tpu.memory_space<vmem>>, vector<1x16xf32>
      %c0_28 = arith.constant 0 : index
      %c0_29 = arith.constant 0 : index
      %27 = vector.load %arg7[%c0_28, %c0_29] : memref<1x16xf32, #tpu.memory_space<vmem>>, vector<1x16xf32>
      %c0_30 = arith.constant 0 : index
      %c0_31 = arith.constant 0 : index
      %28 = vector.load %arg5[%c0_30, %c0_31] : memref<32x16xbf16, #tpu.memory_space<vmem>>, vector<32x16xbf16>
      %c0_32 = arith.constant 0 : index
      %c0_33 = arith.constant 0 : index
      %29 = vector.load %arg16[%c0_32, %c0_33] : memref<2x32xf32, #tpu.memory_space<vmem>>, vector<2x32xf32>
      %cst_34 = arith.constant 1.250000e-01 : f32
      %30 = vector.broadcast %cst_34 : f32 to vector<2x32xf32>
      %31 = arith.mulf %29, %30 : vector<2x32xf32>
      %32 = arith.truncf %31 : vector<2x32xf32> to vector<2x32xbf16>
      %cst_35 = arith.constant dense<0.000000e+00> : vector<2x16xf32>
      %33 = tpu.matmul %32, %28, %cst_35 {dimension_numbers = #tpu.dot_dimension_numbers<[1], [0], [0], [1], [0, 0, 1, 1], [], []>} : vector<2x32xbf16>, vector<32x16xbf16>, vector<2x16xf32> -> vector<2x16xf32>
      %34 = vector.broadcast %26 : vector<1x16xf32> to vector<2x16xf32>
      %35 = arith.addf %33, %34 : vector<2x16xf32>
      %cst_36 = arith.constant 0.000000e+00 : f32
      %36 = vector.broadcast %cst_36 : f32 to vector<2x16xf32>
      %37 = arith.maximumf %35, %36 : vector<2x16xf32>
      %38 = vector.broadcast %27 : vector<1x16xf32> to vector<2x16xf32>
      %39 = arith.mulf %37, %38 : vector<2x16xf32>
      %cst_37 = arith.constant dense<0.000000e+00> : vector<2xf32>
      %40 = vector.multi_reduction <add>, %39, %cst_37 [1] : vector<2x16xf32> to vector<2xf32>
      %41 = vector.shape_cast %40 : vector<2xf32> to vector<2x1xf32>
      %c0_38 = arith.constant 0 : index
      %42 = memref.load %arg14[%c0_38] : memref<3xf32, #tpu.memory_space<smem>>
      %43 = vector.broadcast %42 : f32 to vector<2x1xf32>
      %44 = arith.addf %41, %43 : vector<2x1xf32>
      %c0_i32_39 = arith.constant 0 : i32
      %45 = vector.broadcast %c0_i32_39 : i32 to vector<2x3xi32>
      %46 = arith.cmpi eq, %24, %45 : vector<2x3xi32>
      %cst_40 = arith.constant 0.000000e+00 : f32
      %47 = vector.shape_cast %44 : vector<2x1xf32> to vector<2x1xf32>
      %48 = vector.broadcast %47 : vector<2x1xf32> to vector<2x3xf32>
      %49 = vector.broadcast %cst_40 : f32 to vector<2x3xf32>
      %50 = arith.select %46, %48, %49 : vector<2x3xi1>, vector<2x3xf32>
      %51 = arith.addf %25, %50 : vector<2x3xf32>
      %c0_41 = arith.constant 0 : index
      %c0_42 = arith.constant 0 : index
      %52 = vector.load %arg9[%c0_41, %c0_42] : memref<1x16xf32, #tpu.memory_space<vmem>>, vector<1x16xf32>
      %c0_43 = arith.constant 0 : index
      %c0_44 = arith.constant 0 : index
      %53 = vector.load %arg10[%c0_43, %c0_44] : memref<1x16xf32, #tpu.memory_space<vmem>>, vector<1x16xf32>
      %c0_45 = arith.constant 0 : index
      %c0_46 = arith.constant 0 : index
      %54 = vector.load %arg8[%c0_45, %c0_46] : memref<32x16xbf16, #tpu.memory_space<vmem>>, vector<32x16xbf16>
      %c0_47 = arith.constant 0 : index
      %c0_48 = arith.constant 0 : index
      %55 = vector.load %arg17[%c0_47, %c0_48] : memref<2x32xf32, #tpu.memory_space<vmem>>, vector<2x32xf32>
      %cst_49 = arith.constant 1.250000e-01 : f32
      %56 = vector.broadcast %cst_49 : f32 to vector<2x32xf32>
      %57 = arith.mulf %55, %56 : vector<2x32xf32>
      %58 = arith.truncf %57 : vector<2x32xf32> to vector<2x32xbf16>
      %cst_50 = arith.constant dense<0.000000e+00> : vector<2x16xf32>
      %59 = tpu.matmul %58, %54, %cst_50 {dimension_numbers = #tpu.dot_dimension_numbers<[1], [0], [0], [1], [0, 0, 1, 1], [], []>} : vector<2x32xbf16>, vector<32x16xbf16>, vector<2x16xf32> -> vector<2x16xf32>
      %60 = vector.broadcast %52 : vector<1x16xf32> to vector<2x16xf32>
      %61 = arith.addf %59, %60 : vector<2x16xf32>
      %cst_51 = arith.constant 0.000000e+00 : f32
      %62 = vector.broadcast %cst_51 : f32 to vector<2x16xf32>
      %63 = arith.maximumf %61, %62 : vector<2x16xf32>
      %64 = vector.broadcast %53 : vector<1x16xf32> to vector<2x16xf32>
      %65 = arith.mulf %63, %64 : vector<2x16xf32>
      %cst_52 = arith.constant dense<0.000000e+00> : vector<2xf32>
      %66 = vector.multi_reduction <add>, %65, %cst_52 [1] : vector<2x16xf32> to vector<2xf32>
      %67 = vector.shape_cast %66 : vector<2xf32> to vector<2x1xf32>
      %c1 = arith.constant 1 : index
      %68 = memref.load %arg14[%c1] : memref<3xf32, #tpu.memory_space<smem>>
      %69 = vector.broadcast %68 : f32 to vector<2x1xf32>
      %70 = arith.addf %67, %69 : vector<2x1xf32>
      %c1_i32 = arith.constant 1 : i32
      %71 = vector.broadcast %c1_i32 : i32 to vector<2x3xi32>
      %72 = arith.cmpi eq, %24, %71 : vector<2x3xi32>
      %cst_53 = arith.constant 0.000000e+00 : f32
      %73 = vector.shape_cast %70 : vector<2x1xf32> to vector<2x1xf32>
      %74 = vector.broadcast %73 : vector<2x1xf32> to vector<2x3xf32>
      %75 = vector.broadcast %cst_53 : f32 to vector<2x3xf32>
      %76 = arith.select %72, %74, %75 : vector<2x3xi1>, vector<2x3xf32>
      %77 = arith.addf %51, %76 : vector<2x3xf32>
      %c0_54 = arith.constant 0 : index
      %c0_55 = arith.constant 0 : index
      %78 = vector.load %arg12[%c0_54, %c0_55] : memref<1x16xf32, #tpu.memory_space<vmem>>, vector<1x16xf32>
      %c0_56 = arith.constant 0 : index
      %c0_57 = arith.constant 0 : index
      %79 = vector.load %arg13[%c0_56, %c0_57] : memref<1x16xf32, #tpu.memory_space<vmem>>, vector<1x16xf32>
      %c0_58 = arith.constant 0 : index
      %c0_59 = arith.constant 0 : index
      %80 = vector.load %arg11[%c0_58, %c0_59] : memref<64x16xbf16, #tpu.memory_space<vmem>>, vector<64x16xbf16>
      %c0_60 = arith.constant 0 : index
      %c0_61 = arith.constant 0 : index
      %81 = vector.load %arg18[%c0_60, %c0_61] : memref<2x64xf32, #tpu.memory_space<vmem>>, vector<2x64xf32>
      %cst_62 = arith.constant 1.250000e-01 : f32
      %82 = vector.broadcast %cst_62 : f32 to vector<2x64xf32>
      %83 = arith.mulf %81, %82 : vector<2x64xf32>
      %84 = arith.truncf %83 : vector<2x64xf32> to vector<2x64xbf16>
      %cst_63 = arith.constant dense<0.000000e+00> : vector<2x16xf32>
      %85 = tpu.matmul %84, %80, %cst_63 {dimension_numbers = #tpu.dot_dimension_numbers<[1], [0], [0], [1], [0, 0, 1, 1], [], []>} : vector<2x64xbf16>, vector<64x16xbf16>, vector<2x16xf32> -> vector<2x16xf32>
      %86 = vector.broadcast %78 : vector<1x16xf32> to vector<2x16xf32>
      %87 = arith.addf %85, %86 : vector<2x16xf32>
      %cst_64 = arith.constant 0.000000e+00 : f32
      %88 = vector.broadcast %cst_64 : f32 to vector<2x16xf32>
      %89 = arith.maximumf %87, %88 : vector<2x16xf32>
      %90 = vector.broadcast %79 : vector<1x16xf32> to vector<2x16xf32>
      %91 = arith.mulf %89, %90 : vector<2x16xf32>
      %cst_65 = arith.constant dense<0.000000e+00> : vector<2xf32>
      %92 = vector.multi_reduction <add>, %91, %cst_65 [1] : vector<2x16xf32> to vector<2xf32>
      %93 = vector.shape_cast %92 : vector<2xf32> to vector<2x1xf32>
      %c2 = arith.constant 2 : index
      %94 = memref.load %arg14[%c2] : memref<3xf32, #tpu.memory_space<smem>>
      %95 = vector.broadcast %94 : f32 to vector<2x1xf32>
      %96 = arith.addf %93, %95 : vector<2x1xf32>
      %c2_i32 = arith.constant 2 : i32
      %97 = vector.broadcast %c2_i32 : i32 to vector<2x3xi32>
      %98 = arith.cmpi eq, %24, %97 : vector<2x3xi32>
      %cst_66 = arith.constant 0.000000e+00 : f32
      %99 = vector.shape_cast %96 : vector<2x1xf32> to vector<2x1xf32>
      %100 = vector.broadcast %99 : vector<2x1xf32> to vector<2x3xf32>
      %101 = vector.broadcast %cst_66 : f32 to vector<2x3xf32>
      %102 = arith.select %98, %100, %101 : vector<2x3xi1>, vector<2x3xf32>
      %103 = arith.addf %77, %102 : vector<2x3xf32>
      %cst_67 = arith.constant dense<0xFF800000> : vector<2xf32>
      %104 = vector.multi_reduction <maximumf>, %103, %cst_67 [1] : vector<2x3xf32> to vector<2xf32>
      %105 = vector.shape_cast %104 : vector<2xf32> to vector<2x1xf32>
      %106 = vector.broadcast %105 : vector<2x1xf32> to vector<2x3xf32>
      %107 = arith.subf %103, %106 : vector<2x3xf32>
      %108 = math.exp %107 : vector<2x3xf32>
      %cst_68 = arith.constant dense<0.000000e+00> : vector<2xf32>
      %109 = vector.multi_reduction <add>, %108, %cst_68 [1] : vector<2x3xf32> to vector<2xf32>
      %110 = vector.shape_cast %109 : vector<2xf32> to vector<2x1xf32>
      %111 = vector.broadcast %110 : vector<2x1xf32> to vector<2x3xf32>
      %112 = arith.divf %108, %111 : vector<2x3xf32>
      %c0_69 = arith.constant 0 : index
      %c0_70 = arith.constant 0 : index
      %113 = vector.load %arg15[%c0_69, %c0_70] : memref<2x3xf32, #tpu.memory_space<vmem>>, vector<2x3xf32>
      tpu.vector_store %arg15[%c0_69, %c0_70], %112 {strides = array<i32>} : memref<2x3xf32, #tpu.memory_space<vmem>>, vector<2x3xf32>,
    } else {
    }
    return
  }
  func.func @transform_0(%arg0: i32, %arg1: i32) -> (i32, i32, i32) {
    %c0_i32 = arith.constant 0 : i32
    %c0_i32_0 = arith.constant 0 : i32
    return %arg0, %arg1, %c0_i32 : i32, i32, i32
  }
  func.func @transform_1(%arg0: i32, %arg1: i32) -> (i32, i32, i32) {
    %c0_i32 = arith.constant 0 : i32
    %c0_i32_0 = arith.constant 0 : i32
    return %arg0, %arg1, %c0_i32 : i32, i32, i32
  }
  func.func @transform_2(%arg0: i32, %arg1: i32) -> (i32, i32, i32) {
    %c0_i32 = arith.constant 0 : i32
    %c0_i32_0 = arith.constant 0 : i32
    return %arg0, %arg1, %c0_i32 : i32, i32, i32
  }
  func.func @transform_3(%arg0: i32, %arg1: i32) -> (i32, i32) {
    %c0_i32 = arith.constant 0 : i32
    %c0_i32_0 = arith.constant 0 : i32
    %c0_i32_1 = arith.constant 0 : i32
    return %c0_i32, %c0_i32_0 : i32, i32
  }
  func.func @transform_4(%arg0: i32, %arg1: i32) -> (i32, i32) {
    %c0_i32 = arith.constant 0 : i32
    %c0_i32_0 = arith.constant 0 : i32
    %c0_i32_1 = arith.constant 0 : i32
    return %c0_i32, %c0_i32_0 : i32, i32
  }
  func.func @transform_5(%arg0: i32, %arg1: i32) -> (i32, i32) {
    %c0_i32 = arith.constant 0 : i32
    %c0_i32_0 = arith.constant 0 : i32
    %c0_i32_1 = arith.constant 0 : i32
    return %c0_i32, %c0_i32_0 : i32, i32
  }
  func.func @transform_6(%arg0: i32, %arg1: i32) -> (i32, i32) {
    %c0_i32 = arith.constant 0 : i32
    %c0_i32_0 = arith.constant 0 : i32
    %c0_i32_1 = arith.constant 0 : i32
    return %c0_i32, %c0_i32_0 : i32, i32
  }
  func.func @transform_7(%arg0: i32, %arg1: i32) -> (i32, i32) {
    %c0_i32 = arith.constant 0 : i32
    %c0_i32_0 = arith.constant 0 : i32
    %c0_i32_1 = arith.constant 0 : i32
    return %c0_i32, %c0_i32_0 : i32, i32
  }
  func.func @transform_8(%arg0: i32, %arg1: i32) -> (i32, i32) {
    %c0_i32 = arith.constant 0 : i32
    %c0_i32_0 = arith.constant 0 : i32
    %c0_i32_1 = arith.constant 0 : i32
    return %c0_i32, %c0_i32_0 : i32, i32
  }
  func.func @transform_9(%arg0: i32, %arg1: i32) -> (i32, i32) {
    %c0_i32 = arith.constant 0 : i32
    %c0_i32_0 = arith.constant 0 : i32
    %c0_i32_1 = arith.constant 0 : i32
    return %c0_i32, %c0_i32_0 : i32, i32
  }
  func.func @transform_10(%arg0: i32, %arg1: i32) -> (i32, i32) {
    %c0_i32 = arith.constant 0 : i32
    %c0_i32_0 = arith.constant 0 : i32
    %c0_i32_1 = arith.constant 0 : i32
    return %c0_i32, %c0_i32_0 : i32, i32
  }
  func.func @transform_11(%arg0: i32, %arg1: i32) -> (i32, i32) {
    %c0_i32 = arith.constant 0 : i32
    %c0_i32_0 = arith.constant 0 : i32
    %c0_i32_1 = arith.constant 0 : i32
    return %c0_i32, %c0_i32_0 : i32, i32
  }
  func.func @transform_12(%arg0: i32, %arg1: i32) -> i32 {
    %c0_i32 = arith.constant 0 : i32
    %c0_i32_0 = arith.constant 0 : i32
    return %c0_i32 : i32
  }
  func.func @transform_13(%arg0: i32, %arg1: i32) -> (i32, i32) {
    %c0_i32 = arith.constant 0 : i32
    %c0_i32_0 = arith.constant 0 : i32
    return %arg0, %c0_i32 : i32, i32
  }
}

module attributes {stable_mosaic.version = 11 : i64} {
  func.func @kernel(%arg0: i32, %arg1: i32, %arg2: memref<2x8x32xbf16, #tpu.memory_space<vmem>>, %arg3: memref<2x8x32xbf16, #tpu.memory_space<vmem>>, %arg4: memref<2x8x64xbf16, #tpu.memory_space<vmem>>, %arg5: memref<32x16xbf16, #tpu.memory_space<vmem>>, %arg6: memref<1x16xf32, #tpu.memory_space<vmem>>, %arg7: memref<1x16xf32, #tpu.memory_space<vmem>>, %arg8: memref<32x16xbf16, #tpu.memory_space<vmem>>, %arg9: memref<1x16xf32, #tpu.memory_space<vmem>>, %arg10: memref<1x16xf32, #tpu.memory_space<vmem>>, %arg11: memref<64x16xbf16, #tpu.memory_space<vmem>>, %arg12: memref<1x16xf32, #tpu.memory_space<vmem>>, %arg13: memref<1x16xf32, #tpu.memory_space<vmem>>, %arg14: memref<3xf32, #tpu.memory_space<smem>>, %arg15: memref<2x3xf32, #tpu.memory_space<vmem>>, %arg16: memref<2x32xf32, #tpu.memory_space<vmem>>, %arg17: memref<2x32xf32, #tpu.memory_space<vmem>>, %arg18: memref<2x64xf32, #tpu.memory_space<vmem>>) attributes {dimension_semantics = [#tpu.dimension_semantics<parallel>, #tpu.dimension_semantics<arbitrary>], iteration_bounds = array<i64: 1, 1>, scalar_prefetch = 0 : i64, scratch_operands = 3 : i64, tpu.core_type = #tpu.core_type<tc>, window_params = [{transform_indices = @transform_0, window_bounds = array<i64: 2, 8, 32>}, {transform_indices = @transform_1, window_bounds = array<i64: 2, 8, 32>}, {transform_indices = @transform_2, window_bounds = array<i64: 2, 8, 64>}, {pipeline_mode = #tpu.pipeline_mode<synchronous>, transform_indices = @transform_3, window_bounds = array<i64: 32, 16>}, {pipeline_mode = #tpu.pipeline_mode<synchronous>, transform_indices = @transform_4, window_bounds = array<i64: 1, 16>}, {pipeline_mode = #tpu.pipeline_mode<synchronous>, transform_indices = @transform_5, window_bounds = array<i64: 1, 16>}, {pipeline_mode = #tpu.pipeline_mode<synchronous>, transform_indices = @transform_6, window_bounds = array<i64: 32, 16>}, {pipeline_mode = #tpu.pipeline_mode<synchronous>, transform_indices = @transform_7, window_bounds = array<i64: 1, 16>}, {pipeline_mode = #tpu.pipeline_mode<synchronous>, transform_indices = @transform_8, window_bounds = array<i64: 1, 16>}, {pipeline_mode = #tpu.pipeline_mode<synchronous>, transform_indices = @transform_9, window_bounds = array<i64: 64, 16>}, {pipeline_mode = #tpu.pipeline_mode<synchronous>, transform_indices = @transform_10, window_bounds = array<i64: 1, 16>}, {pipeline_mode = #tpu.pipeline_mode<synchronous>, transform_indices = @transform_11, window_bounds = array<i64: 1, 16>}, {transform_indices = @transform_12, window_bounds = array<i64: 3>}, {transform_indices = @transform_13, window_bounds = array<i64: 2, 3>}]} {
    %c0_i32 = arith.constant 0 : i32
    %0 = arith.cmpi eq, %arg1, %c0_i32 : i32
    %1 = arith.extui %0 : i1 to i32
    %c0_i32_0 = arith.constant 0 : i32
    %2 = arith.cmpi ne, %1, %c0_i32_0 : i32
    scf.if %2 {
      %cst_25 = arith.constant 0.000000e+00 : f32
      %24 = vector.broadcast %cst_25 : f32 to vector<2x32xf32>
      %c0_26 = arith.constant 0 : index
      %c0_27 = arith.constant 0 : index
      %25 = vector.load %arg16[%c0_26, %c0_27] : memref<2x32xf32, #tpu.memory_space<vmem>>, vector<2x32xf32>
      tpu.vector_store %arg16[%c0_26, %c0_27], %24 {strides = array<i32>} : memref<2x32xf32, #tpu.memory_space<vmem>>, vector<2x32xf32>,
      %cst_28 = arith.constant 0.000000e+00 : f32
      %26 = vector.broadcast %cst_28 : f32 to vector<2x32xf32>
      %c0_29 = arith.constant 0 : index
      %c0_30 = arith.constant 0 : index
      %27 = vector.load %arg17[%c0_29, %c0_30] : memref<2x32xf32, #tpu.memory_space<vmem>>, vector<2x32xf32>
      tpu.vector_store %arg17[%c0_29, %c0_30], %26 {strides = array<i32>} : memref<2x32xf32, #tpu.memory_space<vmem>>, vector<2x32xf32>,
      %cst_31 = arith.constant 0.000000e+00 : f32
      %28 = vector.broadcast %cst_31 : f32 to vector<2x64xf32>
      %c0_32 = arith.constant 0 : index
      %c0_33 = arith.constant 0 : index
      %29 = vector.load %arg18[%c0_32, %c0_33] : memref<2x64xf32, #tpu.memory_space<vmem>>, vector<2x64xf32>
      tpu.vector_store %arg18[%c0_32, %c0_33], %28 {strides = array<i32>} : memref<2x64xf32, #tpu.memory_space<vmem>>, vector<2x64xf32>,
    } else {
    }
    %c0 = arith.constant 0 : index
    %c0_1 = arith.constant 0 : index
    %c0_2 = arith.constant 0 : index
    %3 = vector.load %arg2[%c0, %c0_1, %c0_2] : memref<2x8x32xbf16, #tpu.memory_space<vmem>>, vector<2x8x32xbf16>
    %4 = arith.extf %3 : vector<2x8x32xbf16> to vector<2x8x32xf32>
    %cst = arith.constant dense<0.000000e+00> : vector<2x32xf32>
    %5 = vector.multi_reduction <add>, %4, %cst [1] : vector<2x8x32xf32> to vector<2x32xf32>
    %c0_3 = arith.constant 0 : index
    %c0_4 = arith.constant 0 : index
    %6 = vector.load %arg16[%c0_3, %c0_4] : memref<2x32xf32, #tpu.memory_space<vmem>>, vector<2x32xf32>
    %7 = arith.addf %6, %5 : vector<2x32xf32>
    %c0_5 = arith.constant 0 : index
    %c0_6 = arith.constant 0 : index
    %8 = vector.load %arg16[%c0_5, %c0_6] : memref<2x32xf32, #tpu.memory_space<vmem>>, vector<2x32xf32>
    tpu.vector_store %arg16[%c0_5, %c0_6], %7 {strides = array<i32>} : memref<2x32xf32, #tpu.memory_space<vmem>>, vector<2x32xf32>,
    %c0_7 = arith.constant 0 : index
    %c0_8 = arith.constant 0 : index
    %c0_9 = arith.constant 0 : index
    %9 = vector.load %arg3[%c0_7, %c0_8, %c0_9] : memref<2x8x32xbf16, #tpu.memory_space<vmem>>, vector<2x8x32xbf16>
    %10 = arith.extf %9 : vector<2x8x32xbf16> to vector<2x8x32xf32>
    %cst_10 = arith.constant dense<0.000000e+00> : vector<2x32xf32>
    %11 = vector.multi_reduction <add>, %10, %cst_10 [1] : vector<2x8x32xf32> to vector<2x32xf32>
    %c0_11 = arith.constant 0 : index
    %c0_12 = arith.constant 0 : index
    %12 = vector.load %arg17[%c0_11, %c0_12] : memref<2x32xf32, #tpu.memory_space<vmem>>, vector<2x32xf32>
    %13 = arith.addf %12, %11 : vector<2x32xf32>
    %c0_13 = arith.constant 0 : index
    %c0_14 = arith.constant 0 : index
    %14 = vector.load %arg17[%c0_13, %c0_14] : memref<2x32xf32, #tpu.memory_space<vmem>>, vector<2x32xf32>
    tpu.vector_store %arg17[%c0_13, %c0_14], %13 {strides = array<i32>} : memref<2x32xf32, #tpu.memory_space<vmem>>, vector<2x32xf32>,
    %c0_15 = arith.constant 0 : index
    %c0_16 = arith.constant 0 : index
    %c0_17 = arith.constant 0 : index
    %15 = vector.load %arg4[%c0_15, %c0_16, %c0_17] : memref<2x8x64xbf16, #tpu.memory_space<vmem>>, vector<2x8x64xbf16>
    %16 = arith.extf %15 : vector<2x8x64xbf16> to vector<2x8x64xf32>
    %cst_18 = arith.constant dense<0.000000e+00> : vector<2x64xf32>
    %17 = vector.multi_reduction <add>, %16, %cst_18 [1] : vector<2x8x64xf32> to vector<2x64xf32>
    %c0_19 = arith.constant 0 : index
    %c0_20 = arith.constant 0 : index
    %18 = vector.load %arg18[%c0_19, %c0_20] : memref<2x64xf32, #tpu.memory_space<vmem>>, vector<2x64xf32>
    %19 = arith.addf %18, %17 : vector<2x64xf32>
    %c0_21 = arith.constant 0 : index
    %c0_22 = arith.constant 0 : index
    %20 = vector.load %arg18[%c0_21, %c0_22] : memref<2x64xf32, #tpu.memory_space<vmem>>, vector<2x64xf32>
    tpu.vector_store %arg18[%c0_21, %c0_22], %19 {strides = array<i32>} : memref<2x64xf32, #tpu.memory_space<vmem>>, vector<2x64xf32>,
    %c0_i32_23 = arith.constant 0 : i32
    %21 = arith.cmpi eq, %arg1, %c0_i32_23 : i32
    %22 = arith.extui %21 : i1 to i32
    %c0_i32_24 = arith.constant 0 : i32
    %23 = arith.cmpi ne, %22, %c0_i32_24 : i32
    scf.if %23 {
      %24 = tpu.iota {dimensions = array<i32: 1>} : vector<2x3xi32>
      %cst_25 = arith.constant 0.000000e+00 : f32
      %25 = vector.broadcast %cst_25 : f32 to vector<2x3xf32>
      %c0_26 = arith.constant 0 : index
      %c0_27 = arith.constant 0 : index
      %26 = vector.load %arg6[%c0_26, %c0_27] : memref<1x16xf32, #tpu.memory_space<vmem>>, vector<1x16xf32>
      %c0_28 = arith.constant 0 : index
      %c0_29 = arith.constant 0 : index
      %27 = vector.load %arg7[%c0_28, %c0_29] : memref<1x16xf32, #tpu.memory_space<vmem>>, vector<1x16xf32>
      %c0_30 = arith.constant 0 : index
      %c0_31 = arith.constant 0 : index
      %28 = vector.load %arg5[%c0_30, %c0_31] : memref<32x16xbf16, #tpu.memory_space<vmem>>, vector<32x16xbf16>
      %c0_32 = arith.constant 0 : index
      %c0_33 = arith.constant 0 : index
      %29 = vector.load %arg16[%c0_32, %c0_33] : memref<2x32xf32, #tpu.memory_space<vmem>>, vector<2x32xf32>
      %cst_34 = arith.constant 1.250000e-01 : f32
      %30 = vector.broadcast %cst_34 : f32 to vector<2x32xf32>
      %31 = arith.mulf %29, %30 : vector<2x32xf32>
      %32 = arith.truncf %31 : vector<2x32xf32> to vector<2x32xbf16>
      %cst_35 = arith.constant dense<0.000000e+00> : vector<2x16xf32>
      %33 = tpu.matmul %32, %28, %cst_35 {dimension_numbers = #tpu.dot_dimension_numbers<[1], [0], [0], [1], [0, 0, 1, 1], [], []>} : vector<2x32xbf16>, vector<32x16xbf16>, vector<2x16xf32> -> vector<2x16xf32>
      %34 = vector.broadcast %26 : vector<1x16xf32> to vector<2x16xf32>
      %35 = arith.addf %33, %34 : vector<2x16xf32>
      %cst_36 = arith.constant 0.000000e+00 : f32
      %36 = vector.broadcast %cst_36 : f32 to vector<2x16xf32>
      %37 = arith.maximumf %35, %36 : vector<2x16xf32>
      %38 = vector.broadcast %27 : vector<1x16xf32> to vector<2x16xf32>
      %39 = arith.mulf %37, %38 : vector<2x16xf32>
      %cst_37 = arith.constant dense<0.000000e+00> : vector<2xf32>
      %40 = vector.multi_reduction <add>, %39, %cst_37 [1] : vector<2x16xf32> to vector<2xf32>
      %41 = vector.shape_cast %40 : vector<2xf32> to vector<2x1xf32>
      %c0_38 = arith.constant 0 : index
      %42 = memref.load %arg14[%c0_38] : memref<3xf32, #tpu.memory_space<smem>>
      %43 = vector.broadcast %42 : f32 to vector<2x1xf32>
      %44 = arith.addf %41, %43 : vector<2x1xf32>
      %c0_i32_39 = arith.constant 0 : i32
      %45 = vector.broadcast %c0_i32_39 : i32 to vector<2x3xi32>
      %46 = arith.cmpi eq, %24, %45 : vector<2x3xi32>
      %cst_40 = arith.constant 0.000000e+00 : f32
      %47 = vector.shape_cast %44 : vector<2x1xf32> to vector<2x1xf32>
      %48 = vector.broadcast %47 : vector<2x1xf32> to vector<2x3xf32>
      %49 = vector.broadcast %cst_40 : f32 to vector<2x3xf32>
      %50 = arith.select %46, %48, %49 : vector<2x3xi1>, vector<2x3xf32>
      %51 = arith.addf %25, %50 : vector<2x3xf32>
      %c0_41 = arith.constant 0 : index
      %c0_42 = arith.constant 0 : index
      %52 = vector.load %arg9[%c0_41, %c0_42] : memref<1x16xf32, #tpu.memory_space<vmem>>, vector<1x16xf32>
      %c0_43 = arith.constant 0 : index
      %c0_44 = arith.constant 0 : index
      %53 = vector.load %arg10[%c0_43, %c0_44] : memref<1x16xf32, #tpu.memory_space<vmem>>, vector<1x16xf32>
      %c0_45 = arith.constant 0 : index
      %c0_46 = arith.constant 0 : index
      %54 = vector.load %arg8[%c0_45, %c0_46] : memref<32x16xbf16, #tpu.memory_space<vmem>>, vector<32x16xbf16>
      %c0_47 = arith.constant 0 : index
      %c0_48 = arith.constant 0 : index
      %55 = vector.load %arg17[%c0_47, %c0_48] : memref<2x32xf32, #tpu.memory_space<vmem>>, vector<2x32xf32>
      %cst_49 = arith.constant 1.250000e-01 : f32
      %56 = vector.broadcast %cst_49 : f32 to vector<2x32xf32>
      %57 = arith.mulf %55, %56 : vector<2x32xf32>
      %58 = arith.truncf %57 : vector<2x32xf32> to vector<2x32xbf16>
      %cst_50 = arith.constant dense<0.000000e+00> : vector<2x16xf32>
      %59 = tpu.matmul %58, %54, %cst_50 {dimension_numbers = #tpu.dot_dimension_numbers<[1], [0], [0], [1], [0, 0, 1, 1], [], []>} : vector<2x32xbf16>, vector<32x16xbf16>, vector<2x16xf32> -> vector<2x16xf32>
      %60 = vector.broadcast %52 : vector<1x16xf32> to vector<2x16xf32>
      %61 = arith.addf %59, %60 : vector<2x16xf32>
      %cst_51 = arith.constant 0.000000e+00 : f32
      %62 = vector.broadcast %cst_51 : f32 to vector<2x16xf32>
      %63 = arith.maximumf %61, %62 : vector<2x16xf32>
      %64 = vector.broadcast %53 : vector<1x16xf32> to vector<2x16xf32>
      %65 = arith.mulf %63, %64 : vector<2x16xf32>
      %cst_52 = arith.constant dense<0.000000e+00> : vector<2xf32>
      %66 = vector.multi_reduction <add>, %65, %cst_52 [1] : vector<2x16xf32> to vector<2xf32>
      %67 = vector.shape_cast %66 : vector<2xf32> to vector<2x1xf32>
      %c1 = arith.constant 1 : index
      %68 = memref.load %arg14[%c1] : memref<3xf32, #tpu.memory_space<smem>>
      %69 = vector.broadcast %68 : f32 to vector<2x1xf32>
      %70 = arith.addf %67, %69 : vector<2x1xf32>
      %c1_i32 = arith.constant 1 : i32
      %71 = vector.broadcast %c1_i32 : i32 to vector<2x3xi32>
      %72 = arith.cmpi eq, %24, %71 : vector<2x3xi32>
      %cst_53 = arith.constant 0.000000e+00 : f32
      %73 = vector.shape_cast %70 : vector<2x1xf32> to vector<2x1xf32>
      %74 = vector.broadcast %73 : vector<2x1xf32> to vector<2x3xf32>
      %75 = vector.broadcast %cst_53 : f32 to vector<2x3xf32>
      %76 = arith.select %72, %74, %75 : vector<2x3xi1>, vector<2x3xf32>
      %77 = arith.addf %51, %76 : vector<2x3xf32>
      %c0_54 = arith.constant 0 : index
      %c0_55 = arith.constant 0 : index
      %78 = vector.load %arg12[%c0_54, %c0_55] : memref<1x16xf32, #tpu.memory_space<vmem>>, vector<1x16xf32>
      %c0_56 = arith.constant 0 : index
      %c0_57 = arith.constant 0 : index
      %79 = vector.load %arg13[%c0_56, %c0_57] : memref<1x16xf32, #tpu.memory_space<vmem>>, vector<1x16xf32>
      %c0_58 = arith.constant 0 : index
      %c0_59 = arith.constant 0 : index
      %80 = vector.load %arg11[%c0_58, %c0_59] : memref<64x16xbf16, #tpu.memory_space<vmem>>, vector<64x16xbf16>
      %c0_60 = arith.constant 0 : index
      %c0_61 = arith.constant 0 : index
      %81 = vector.load %arg18[%c0_60, %c0_61] : memref<2x64xf32, #tpu.memory_space<vmem>>, vector<2x64xf32>
      %cst_62 = arith.constant 1.250000e-01 : f32
      %82 = vector.broadcast %cst_62 : f32 to vector<2x64xf32>
      %83 = arith.mulf %81, %82 : vector<2x64xf32>
      %84 = arith.truncf %83 : vector<2x64xf32> to vector<2x64xbf16>
      %cst_63 = arith.constant dense<0.000000e+00> : vector<2x16xf32>
      %85 = tpu.matmul %84, %80, %cst_63 {dimension_numbers = #tpu.dot_dimension_numbers<[1], [0], [0], [1], [0, 0, 1, 1], [], []>} : vector<2x64xbf16>, vector<64x16xbf16>, vector<2x16xf32> -> vector<2x16xf32>
      %86 = vector.broadcast %78 : vector<1x16xf32> to vector<2x16xf32>
      %87 = arith.addf %85, %86 : vector<2x16xf32>
      %cst_64 = arith.constant 0.000000e+00 : f32
      %88 = vector.broadcast %cst_64 : f32 to vector<2x16xf32>
      %89 = arith.maximumf %87, %88 : vector<2x16xf32>
      %90 = vector.broadcast %79 : vector<1x16xf32> to vector<2x16xf32>
      %91 = arith.mulf %89, %90 : vector<2x16xf32>
      %cst_65 = arith.constant dense<0.000000e+00> : vector<2xf32>
      %92 = vector.multi_reduction <add>, %91, %cst_65 [1] : vector<2x16xf32> to vector<2xf32>
      %93 = vector.shape_cast %92 : vector<2xf32> to vector<2x1xf32>
      %c2 = arith.constant 2 : index
      %94 = memref.load %arg14[%c2] : memref<3xf32, #tpu.memory_space<smem>>
      %95 = vector.broadcast %94 : f32 to vector<2x1xf32>
      %96 = arith.addf %93, %95 : vector<2x1xf32>
      %c2_i32 = arith.constant 2 : i32
      %97 = vector.broadcast %c2_i32 : i32 to vector<2x3xi32>
      %98 = arith.cmpi eq, %24, %97 : vector<2x3xi32>
      %cst_66 = arith.constant 0.000000e+00 : f32
      %99 = vector.shape_cast %96 : vector<2x1xf32> to vector<2x1xf32>
      %100 = vector.broadcast %99 : vector<2x1xf32> to vector<2x3xf32>
      %101 = vector.broadcast %cst_66 : f32 to vector<2x3xf32>
      %102 = arith.select %98, %100, %101 : vector<2x3xi1>, vector<2x3xf32>
      %103 = arith.addf %77, %102 : vector<2x3xf32>
      %cst_67 = arith.constant dense<0xFF800000> : vector<2xf32>
      %104 = vector.multi_reduction <maximumf>, %103, %cst_67 [1] : vector<2x3xf32> to vector<2xf32>
      %105 = vector.shape_cast %104 : vector<2xf32> to vector<2x1xf32>
      %106 = vector.broadcast %105 : vector<2x1xf32> to vector<2x3xf32>
      %107 = arith.subf %103, %106 : vector<2x3xf32>
      %108 = math.exp %107 : vector<2x3xf32>
      %cst_68 = arith.constant dense<0.000000e+00> : vector<2xf32>
      %109 = vector.multi_reduction <add>, %108, %cst_68 [1] : vector<2x3xf32> to vector<2xf32>
      %110 = vector.shape_cast %109 : vector<2xf32> to vector<2x1xf32>
      %111 = vector.broadcast %110 : vector<2x1xf32> to vector<2x3xf32>
      %112 = arith.divf %108, %111 : vector<2x3xf32>
      %c0_69 = arith.constant 0 : index
      %c0_70 = arith.constant 0 : index
      %113 = vector.load %arg15[%c0_69, %c0_70] : memref<2x3xf32, #tpu.memory_space<vmem>>, vector<2x3xf32>
      tpu.vector_store %arg15[%c0_69, %c0_70], %112 {strides = array<i32>} : memref<2x3xf32, #tpu.memory_space<vmem>>, vector<2x3xf32>,
    } else {
    }
    return
  }
  func.func @transform_0(%arg0: i32, %arg1: i32) -> (i32, i32, i32) {
    %c0_i32 = arith.constant 0 : i32
    %c0_i32_0 = arith.constant 0 : i32
    return %arg0, %arg1, %c0_i32 : i32, i32, i32
  }
  func.func @transform_1(%arg0: i32, %arg1: i32) -> (i32, i32, i32) {
    %c0_i32 = arith.constant 0 : i32
    %c0_i32_0 = arith.constant 0 : i32
    return %arg0, %arg1, %c0_i32 : i32, i32, i32
  }
  func.func @transform_2(%arg0: i32, %arg1: i32) -> (i32, i32, i32) {
    %c0_i32 = arith.constant 0 : i32
    %c0_i32_0 = arith.constant 0 : i32
    return %arg0, %arg1, %c0_i32 : i32, i32, i32
  }
  func.func @transform_3(%arg0: i32, %arg1: i32) -> (i32, i32) {
    %c0_i32 = arith.constant 0 : i32
    %c0_i32_0 = arith.constant 0 : i32
    %c0_i32_1 = arith.constant 0 : i32
    return %c0_i32, %c0_i32_0 : i32, i32
  }
  func.func @transform_4(%arg0: i32, %arg1: i32) -> (i32, i32) {
    %c0_i32 = arith.constant 0 : i32
    %c0_i32_0 = arith.constant 0 : i32
    %c0_i32_1 = arith.constant 0 : i32
    return %c0_i32, %c0_i32_0 : i32, i32
  }
  func.func @transform_5(%arg0: i32, %arg1: i32) -> (i32, i32) {
    %c0_i32 = arith.constant 0 : i32
    %c0_i32_0 = arith.constant 0 : i32
    %c0_i32_1 = arith.constant 0 : i32
    return %c0_i32, %c0_i32_0 : i32, i32
  }
  func.func @transform_6(%arg0: i32, %arg1: i32) -> (i32, i32) {
    %c0_i32 = arith.constant 0 : i32
    %c0_i32_0 = arith.constant 0 : i32
    %c0_i32_1 = arith.constant 0 : i32
    return %c0_i32, %c0_i32_0 : i32, i32
  }
  func.func @transform_7(%arg0: i32, %arg1: i32) -> (i32, i32) {
    %c0_i32 = arith.constant 0 : i32
    %c0_i32_0 = arith.constant 0 : i32
    %c0_i32_1 = arith.constant 0 : i32
    return %c0_i32, %c0_i32_0 : i32, i32
  }
  func.func @transform_8(%arg0: i32, %arg1: i32) -> (i32, i32) {
    %c0_i32 = arith.constant 0 : i32
    %c0_i32_0 = arith.constant 0 : i32
    %c0_i32_1 = arith.constant 0 : i32
    return %c0_i32, %c0_i32_0 : i32, i32
  }
  func.func @transform_9(%arg0: i32, %arg1: i32) -> (i32, i32) {
    %c0_i32 = arith.constant 0 : i32
    %c0_i32_0 = arith.constant 0 : i32
    %c0_i32_1 = arith.constant 0 : i32
    return %c0_i32, %c0_i32_0 : i32, i32
  }
  func.func @transform_10(%arg0: i32, %arg1: i32) -> (i32, i32) {
    %c0_i32 = arith.constant 0 : i32
    %c0_i32_0 = arith.constant 0 : i32
    %c0_i32_1 = arith.constant 0 : i32
    return %c0_i32, %c0_i32_0 : i32, i32
  }
  func.func @transform_11(%arg0: i32, %arg1: i32) -> (i32, i32) {
    %c0_i32 = arith.constant 0 : i32
    %c0_i32_0 = arith.constant 0 : i32
    %c0_i32_1 = arith.constant 0 : i32
    return %c0_i32, %c0_i32_0 : i32, i32
  }
  func.func @transform_12(%arg0: i32, %arg1: i32) -> i32 {
    %c0_i32 = arith.constant 0 : i32
    %c0_i32_0 = arith.constant 0 : i32
    return %c0_i32 : i32
  }
  func.func @transform_13(%arg0: i32, %arg1: i32) -> (i32, i32) {
    %c0_i32 = arith.constant 0 : i32
    %c0_i32_0 = arith.constant 0 : i32
    return %arg0, %c0_i32 : i32, i32
  }
}

</mosaic_0001>

<llo_original>
// kernel: tpu_custom_call.1
$region0: #{tpu_custom_call.1}
  #allocation0 [shape = 'u32[]', space=smem, size = 0x4, offset = 0x4, fixed_abs, tag = 'smem constant byte address 0x4 - core index']
  #allocation1 [shape = 'u32[72,128]{1,0:T(1,128)}', space=vmem, size = 0x9000, scoped, tag = 'internal scratch']
  #allocation2 [shape = 'f32[2,32]{1,0:T(2,128)}', space=vmem, size = 0x400, scoped, tag = 'scratch operand']
  #allocation3 [shape = 'f32[2,32]{1,0:T(2,128)}', space=vmem, size = 0x400, scoped, tag = 'scratch operand']
  #allocation4 [shape = 'f32[2,64]{1,0:T(2,128)}', space=vmem, size = 0x400, scoped, tag = 'scratch operand']
  %s0 = inlined_call_operand.vmem [shape: bf16[2,8,32], index: 0, kind: input, shape index: {}]
  %s1 = inlined_call_operand.vmem [shape: bf16[2,8,32], index: 1, kind: input, shape index: {}]
  %s2 = inlined_call_operand.vmem [shape: bf16[2,8,64], index: 2, kind: input, shape index: {}]
  %s3 = inlined_call_operand.vmem [shape: bf16[32,16], index: 3, kind: input, shape index: {}]
  %s4 = inlined_call_operand.vmem [shape: f32[1,16], index: 4, kind: input, shape index: {}]
  %s5 = inlined_call_operand.vmem [shape: f32[1,16], index: 5, kind: input, shape index: {}]
  %s6 = inlined_call_operand.vmem [shape: bf16[32,16], index: 6, kind: input, shape index: {}]
  %s7 = inlined_call_operand.vmem [shape: f32[1,16], index: 7, kind: input, shape index: {}]
  %s8 = inlined_call_operand.vmem [shape: f32[1,16], index: 8, kind: input, shape index: {}]
  %s9 = inlined_call_operand.vmem [shape: bf16[64,16], index: 9, kind: input, shape index: {}]
  %s10 = inlined_call_operand.vmem [shape: f32[1,16], index: 10, kind: input, shape index: {}]
  %s11 = inlined_call_operand.vmem [shape: f32[1,16], index: 11, kind: input, shape index: {}]
  %s12 = inlined_call_operand.vmem [shape: f32[3], index: 12, kind: input, shape index: {}]
  %s13 = inlined_call_operand.hbm [shape: f32[2,3], index: 13, kind: output, shape index: {}]
  %s14 = sld [smem:[#allocation0]]
  $region74: #{tpu_custom_call.1} parent=0
    _
  %s16 = ssub.s32 1, %s14
  %s17 = scalar_select 0, %s16, %s14
  $region1: #{tpu_custom_call.1} parent=0
    #allocation5 [shape = 'u8[512]{0}', space=smem, size = 0x200, scoped, tag = 'input window, operand 12, single buffered']
    #allocation6 [shape = 's32[1]{0}', space=sflag, size = 0x4, scoped, tag = 'scoped memory for tpu_custom_call.1']
    #allocation7 [shape = 's32[1]{0}', space=sflag, size = 0x4, scoped, tag = 'scoped memory for tpu_custom_call.1']
    #allocation8 [shape = 'u8[1024]{0}', space=vmem, size = 0x400, scoped, tag = 'output window, operand 0, single buffered']
    %18 = vsyncpa [#allocation7], 0
    %19 = vsyncpa [#allocation6], 0
    // Predicated region
    $region2: #{tpu_custom_call.1} parent=1 // pred_check
      _
    $region3: #{tpu_custom_call.1} parent=1 // pred_check_branch
      %21 = sbr.rel (0) target = $region5
    $region4: #{tpu_custom_call.1} parent=1 // pred_region
      _
    $region5: #{tpu_custom_call.1} parent=1 // pred_fallthru
      _
    // Predicated region
    $region6: #{tpu_custom_call.1} parent=1 // pred_check
      _
    $region7: #{tpu_custom_call.1} parent=1 // pred_check_branch
      %23 = sbr.rel (0) target = $region9
    $region8: #{tpu_custom_call.1} parent=1 // pred_region
      _
    $region9: #{tpu_custom_call.1} parent=1 // pred_fallthru
      _
    // Predicated region
    $region10: #{tpu_custom_call.1} parent=1 // pred_check
      _
    $region11: #{tpu_custom_call.1} parent=1 // pred_check_branch
      %25 = sbr.rel (0) target = $region13
    $region12: #{tpu_custom_call.1} parent=1 // pred_region
      _
    $region13: #{tpu_custom_call.1} parent=1 // pred_fallthru
      _
    // Predicated region
    $region14: #{tpu_custom_call.1} parent=1 // pred_check
      _
    $region15: #{tpu_custom_call.1} parent=1 // pred_check_branch
      %27 = sbr.rel (0) target = $region17
    $region16: #{tpu_custom_call.1} parent=1 // pred_region
      _
    $region17: #{tpu_custom_call.1} parent=1 // pred_fallthru
      _
    // Predicated region
    $region18: #{tpu_custom_call.1} parent=1 // pred_check
      _
    $region19: #{tpu_custom_call.1} parent=1 // pred_check_branch
      %29 = sbr.rel (0) target = $region21
    $region20: #{tpu_custom_call.1} parent=1 // pred_region
      _
    $region21: #{tpu_custom_call.1} parent=1 // pred_fallthru
      _
    // Predicated region
    $region22: #{tpu_custom_call.1} parent=1 // pred_check
      _
    $region23: #{tpu_custom_call.1} parent=1 // pred_check_branch
      %31 = sbr.rel (0) target = $region25
    $region24: #{tpu_custom_call.1} parent=1 // pred_region
      _
    $region25: #{tpu_custom_call.1} parent=1 // pred_fallthru
      _
    // Predicated region
    $region26: #{tpu_custom_call.1} parent=1 // pred_check
      _
    $region27: #{tpu_custom_call.1} parent=1 // pred_check_branch
      %33 = sbr.rel (0) target = $region29
    $region28: #{tpu_custom_call.1} parent=1 // pred_region
      _
    $region29: #{tpu_custom_call.1} parent=1 // pred_fallthru
      _
    // Predicated region
    $region30: #{tpu_custom_call.1} parent=1 // pred_check
      _
    $region31: #{tpu_custom_call.1} parent=1 // pred_check_branch
      %35 = sbr.rel (0) target = $region33
    $region32: #{tpu_custom_call.1} parent=1 // pred_region
      _
    $region33: #{tpu_custom_call.1} parent=1 // pred_fallthru
      _
    // Predicated region
    $region34: #{tpu_custom_call.1} parent=1 // pred_check
      _
    $region35: #{tpu_custom_call.1} parent=1 // pred_check_branch
      %37 = sbr.rel (0) target = $region37
    $region36: #{tpu_custom_call.1} parent=1 // pred_region
      _
    $region37: #{tpu_custom_call.1} parent=1 // pred_fallthru
      _
    // Predicated region
    $region38: #{tpu_custom_call.1} parent=1 // pred_check
      _
    $region39: #{tpu_custom_call.1} parent=1 // pred_check_branch
      %39 = sbr.rel (0) target = $region41
    $region40: #{tpu_custom_call.1} parent=1 // pred_region
      _
    $region41: #{tpu_custom_call.1} parent=1 // pred_fallthru
      _
    // Predicated region
    $region42: #{tpu_custom_call.1} parent=1 // pred_check
      _
    $region43: #{tpu_custom_call.1} parent=1 // pred_check_branch
      %41 = sbr.rel (0) target = $region45
    $region44: #{tpu_custom_call.1} parent=1 // pred_region
      _
    $region45: #{tpu_custom_call.1} parent=1 // pred_fallthru
      _
    // Predicated region
    $region46: #{tpu_custom_call.1} parent=1 // pred_check
      _
    $region47: #{tpu_custom_call.1} parent=1 // pred_check_branch
      %43 = sbr.rel (0) target = $region49
    $region48: #{tpu_custom_call.1} parent=1 // pred_region
      _
    $region49: #{tpu_custom_call.1} parent=1 // pred_fallthru
      _
    // Predicated region
    $region50: #{tpu_custom_call.1} parent=1 // pred_check
      _
    $region51: #{tpu_custom_call.1} parent=1 // pred_check_branch
      %45 = sbr.rel (0) target = $region53
    $region52: #{tpu_custom_call.1} parent=1 // pred_region
      %47 = vsyncadd [#allocation7], 0
      %s49 = sshll.u32 %s12, 4
      %s50 = int_to_ptr.vmem [resolvable:$true] %s49
      %52 = dma.vmem_to_smem %s50, 16, [#allocation5], [#allocation7]
    $region53: #{tpu_custom_call.1} parent=1 // pred_fallthru
      _
    // Predicated region
    $region54: #{tpu_custom_call.1} parent=1 // pred_check
      _
    $region55: #{tpu_custom_call.1} parent=1 // pred_check_branch
      %54 = sbr.rel (0) target = $region57
    $region56: #{tpu_custom_call.1} parent=1 // pred_region
      %56 = dma.done [#allocation7], 16
    $region57: #{tpu_custom_call.1} parent=1 // pred_fallthru
      _
    %57 = sfence
    %p59 = scmp.eq.s32.totalorder 0, 0
    // Predicated region
    $region58: #{tpu_custom_call.1} parent=1 // pred_check
      %p60 = pneg %p59
    $region59: #{tpu_custom_call.1} parent=1 // pred_check_branch
      %62 = sbr.rel (%p60) target = $region61
    $region60: #{tpu_custom_call.1} parent=1 // pred_region
      %vm63 = vcmask 254976
      %64 = vst.msk [vmem:[#allocation2] sm:$0x3] %vm63, 0.0
      %65 = vst.msk [vmem:[#allocation3] sm:$0x3] %vm63, 0.0
      %vm66 = vcmask 517120
      %67 = vst.msk [vmem:[#allocation4] sm:$0x3] %vm66, 0.0
    $region61: #{tpu_custom_call.1} parent=1 // pred_fallthru
      _
    %v68 = vld [vmem:[%s0] sm:$0xf]
    %v69 = vld [vmem:[%s0 + $0x4] sm:$0xf]
    %v70 = vunpack.c.l.bf16 %v68
    %v71 = vunpack.c.l.bf16 %v69
    %vm72 = vcmask 261120
    %v73 = vsel %vm72, %v70, 0.0
    %v74 = vrot.slane %v73, 4
    %v75 = vadd.f32 %v73, %v74
    %v76 = vrot.slane %v75, 2
    %v77 = vadd.f32 %v75, %v76
    %v78 = vrot.slane %v77, 1
    %v79 = vadd.f32 %v77, %v78
    %v80 = vsel %vm72, %v71, 0.0
    %v81 = vrot.slane %v80, 4
    %v82 = vadd.f32 %v80, %v81
    %v83 = vrot.slane %v82, 2
    %v84 = vadd.f32 %v82, %v83
    %v85 = vrot.slane %v84, 1
    %v86 = vadd.f32 %v84, %v85
    %v87 = vld [vmem:[#allocation2] sm:$0x3]
    %vm90 = vcmask 1041409
    %v91 = vsel %vm90, %v86, %v79
    %v93 = vadd.f32 %v87, %v91
    %vm94 = vcmask 254976
    %95 = vst.msk [vmem:[#allocation2] sm:$0x3] %vm94, %v93
    %v96 = vld [vmem:[%s1] sm:$0xf]
    %v97 = vld [vmem:[%s1 + $0x4] sm:$0xf]
    %v98 = vunpack.c.l.bf16 %v96
    %v99 = vunpack.c.l.bf16 %v97
    %v100 = vsel %vm72, %v98, 0.0
    %v101 = vrot.slane %v100, 4
    %v102 = vadd.f32 %v100, %v101
    %v103 = vrot.slane %v102, 2
    %v104 = vadd.f32 %v102, %v103
    %v105 = vrot.slane %v104, 1
    %v106 = vadd.f32 %v104, %v105
    %v107 = vsel %vm72, %v99, 0.0
    %v108 = vrot.slane %v107, 4
    %v109 = vadd.f32 %v107, %v108
    %v110 = vrot.slane %v109, 2
    %v111 = vadd.f32 %v109, %v110
    %v112 = vrot.slane %v111, 1
    %v113 = vadd.f32 %v111, %v112
    %v114 = vld [vmem:[#allocation3] sm:$0x3]
    %v117 = vsel %vm90, %v113, %v106
    %v119 = vadd.f32 %v114, %v117
    %120 = vst.msk [vmem:[#allocation3] sm:$0x3] %vm94, %v119
    %v121 = vld [vmem:[%s2] sm:$0xf]
    %v122 = vld [vmem:[%s2 + $0x4] sm:$0xf]
    %v123 = vunpack.c.l.bf16 %v121
    %v124 = vunpack.c.l.bf16 %v122
    %vm125 = vcmask 523264
    %v126 = vsel %vm125, %v123, 0.0
    %v127 = vrot.slane %v126, 4
    %v128 = vadd.f32 %v126, %v127
    %v129 = vrot.slane %v128, 2
    %v130 = vadd.f32 %v128, %v129
    %v131 = vrot.slane %v130, 1
    %v132 = vadd.f32 %v130, %v131
    %v133 = vsel %vm125, %v124, 0.0
    %v134 = vrot.slane %v133, 4
    %v135 = vadd.f32 %v133, %v134
    %v136 = vrot.slane %v135, 2
    %v137 = vadd.f32 %v135, %v136
    %v138 = vrot.slane %v137, 1
    %v139 = vadd.f32 %v137, %v138
    %v140 = vld [vmem:[#allocation4] sm:$0x3]
    %v143 = vsel %vm90, %v139, %v132
    %v145 = vadd.f32 %v140, %v143
    %vm146 = vcmask 517120
    %147 = vst.msk [vmem:[#allocation4] sm:$0x3] %vm146, %v145
    // Predicated region
    $region62: #{tpu_custom_call.1} parent=1 // pred_check
      %p148 = pneg %p59
    $region63: #{tpu_custom_call.1} parent=1 // pred_check_branch
      %150 = sbr.rel (%p148) target = $region65
    $region64: #{tpu_custom_call.1} parent=1 // pred_region
      %v151 = vlaneseq
      %v152 = vand.u32 %v151, 127
      %v153 = vld [vmem:[%s4] sm:$0x1]
      %v154 = vld [vmem:[%s5] sm:$0x1]
      %v155 = vld [vmem:[%s3] sm:$0xf]
      %v156 = vld [vmem:[%s3 + $0x4] sm:$0xf]
      %v157 = vld [vmem:[%s3 + $0x8] sm:$0xf]
      %v158 = vld [vmem:[%s3 + $0xc] sm:$0xf]
      %v159 = vld [vmem:[#allocation2] sm:$0x3]
      %v160 = vmul.f32 %v159, 0.125
      %v161 = vpack.c.bf16 %v160, %v160
      %v163 = vperm.slane %v153, 0
      %v169 = vunpack.c.l.b16 %v155
      %v170 = vunpack.c.l.b16 %v156
      %v171 = vunpack.c.l.b16 %v157
      %v172 = vunpack.c.l.b16 %v158
      %v173 = vpack.c.b16 %v170, %v169
      %v174 = vpack.c.b16 %v172, %v171
      %v178 = vsel %vm72, %v161, 0
      %180 = vmatpush.bf16.msra.mxu0 0
      %181 = vmatpush.bf16.msra.mxu0 0
      %182 = vmatpush.bf16.msra.mxu0 0
      %183 = vmatpush.bf16.msra.mxu0 0
      %184 = vmatpush.bf16.msra.mxu0 0
      %185 = vmatpush.bf16.msra.mxu0 0
      %186 = vmatpush.bf16.msra.mxu0 %v174
      %187 = vmatpush.bf16.msra.mxu0 %v173
      %188 = vmatmul.bf16.gmra.mxu0 %v178
      %v189 = vpop.f32.mrf.mxu0
      %v190 = vadd.f32 %v163, %v189
      %v191 = vpop.f32.mrf.mxu0
      %192 = vdwg.mxu0
      %v193 = vmax.f32 %v190, 0.0
      %v195 = vperm.slane %v154, 0
      %v197 = vmul.f32 %v193, %v195
      %vm198 = vcmask 123904
      %v199 = vsel %vm198, %v197, 0.0
      %200 = vadd.xlane.f32.xlu0 %v199
      %v201 = vpop.xlane.xlu0 %200
      %s202 = sld [smem:[#allocation5]]
      %v203 = vstv %s202
      %v204 = vadd.f32 %v201, %v203
      %vm205 = vcmp.eq.s32.totalorder %v152, 0
      %v206 = vsel %vm205, %v204, 0.0
      %v207 = vadd.f32 %v206, 0.0
      %v208 = vld [vmem:[%s7] sm:$0x1]
      %v209 = vld [vmem:[%s8] sm:$0x1]
      %v210 = vld [vmem:[%s6] sm:$0xf]
      %v211 = vld [vmem:[%s6 + $0x4] sm:$0xf]
      %v212 = vld [vmem:[%s6 + $0x8] sm:$0xf]
      %v213 = vld [vmem:[%s6 + $0xc] sm:$0xf]
      %v214 = vld [vmem:[#allocation3] sm:$0x3]
      %v215 = vmul.f32 %v214, 0.125
      %v216 = vpack.c.bf16 %v215, %v215
      %v218 = vperm.slane %v208, 0
      %v224 = vunpack.c.l.b16 %v210
      %v225 = vunpack.c.l.b16 %v211
      %v226 = vunpack.c.l.b16 %v212
      %v227 = vunpack.c.l.b16 %v213
      %v228 = vpack.c.b16 %v225, %v224
      %v229 = vpack.c.b16 %v227, %v226
      %v233 = vsel %vm72, %v216, 0
      %235 = vmatpush.bf16.msra.mxu0 0
      %236 = vmatpush.bf16.msra.mxu0 0
      %237 = vmatpush.bf16.msra.mxu0 0
      %238 = vmatpush.bf16.msra.mxu0 0
      %239 = vmatpush.bf16.msra.mxu0 0
      %240 = vmatpush.bf16.msra.mxu0 0
      %241 = vmatpush.bf16.msra.mxu0 %v229
      %242 = vmatpush.bf16.msra.mxu0 %v228
      %243 = vmatmul.bf16.gmra.mxu0 %v233
      %v244 = vpop.f32.mrf.mxu0
      %v245 = vadd.f32 %v218, %v244
      %v246 = vpop.f32.mrf.mxu0
      %247 = vdwg.mxu0
      %v248 = vmax.f32 %v245, 0.0
      %v250 = vperm.slane %v209, 0
      %v252 = vmul.f32 %v248, %v250
      %v253 = vsel %vm198, %v252, 0.0
      %254 = vadd.xlane.f32.xlu0 %v253
      %v255 = vpop.xlane.xlu0 %254
      %s256 = sld [smem:[#allocation5 + $0x1]]
      %v257 = vstv %s256
      %v258 = vadd.f32 %v255, %v257
      %vm259 = vcmp.eq.s32.totalorder %v152, 1
      %v260 = vsel %vm259, %v258, 0.0
      %v261 = vadd.f32 %v207, %v260
      %v262 = vld [vmem:[%s10] sm:$0x1]
      %v263 = vld [vmem:[%s11] sm:$0x1]
      %v264 = vld [vmem:[%s9] sm:$0xf]
      %v265 = vld [vmem:[%s9 + $0x4] sm:$0xf]
      %v266 = vld [vmem:[%s9 + $0x8] sm:$0xf]
      %v267 = vld [vmem:[%s9 + $0xc] sm:$0xf]
      %v268 = vld [vmem:[%s9 + $0x10] sm:$0xf]
      %v269 = vld [vmem:[%s9 + $0x14] sm:$0xf]
      %v270 = vld [vmem:[%s9 + $0x18] sm:$0xf]
      %v271 = vld [vmem:[%s9 + $0x1c] sm:$0xf]
      %v272 = vld [vmem:[#allocation4] sm:$0x3]
      %v273 = vmul.f32 %v272, 0.125
      %v274 = vpack.c.bf16 %v273, %v273
      %v276 = vperm.slane %v262, 0
      %v286 = vunpack.c.l.b16 %v264
      %v287 = vunpack.c.l.b16 %v265
      %v288 = vunpack.c.l.b16 %v266
      %v289 = vunpack.c.l.b16 %v267
      %v290 = vunpack.c.l.b16 %v268
      %v291 = vunpack.c.l.b16 %v269
      %v292 = vunpack.c.l.b16 %v270
      %v293 = vunpack.c.l.b16 %v271
      %v294 = vpack.c.b16 %v287, %v286
      %v295 = vpack.c.b16 %v289, %v288
      %v296 = vpack.c.b16 %v291, %v290
      %v297 = vpack.c.b16 %v293, %v292
      %v303 = vsel %vm125, %v274, 0
      %305 = vmatpush.bf16.msra.mxu0 0
      %306 = vmatpush.bf16.msra.mxu0 0
      %307 = vmatpush.bf16.msra.mxu0 0
      %308 = vmatpush.bf16.msra.mxu0 0
      %309 = vmatpush.bf16.msra.mxu0 %v297
      %310 = vmatpush.bf16.msra.mxu0 %v296
      %311 = vmatpush.bf16.msra.mxu0 %v295
      %312 = vmatpush.bf16.msra.mxu0 %v294
      %313 = vmatmul.bf16.gmra.mxu0 %v303
      %v314 = vpop.f32.mrf.mxu0
      %v315 = vadd.f32 %v276, %v314
      %v316 = vpop.f32.mrf.mxu0
      %317 = vdwg.mxu0
      %v318 = vmax.f32 %v315, 0.0
      %v320 = vperm.slane %v263, 0
      %v322 = vmul.f32 %v318, %v320
      %v323 = vsel %vm198, %v322, 0.0
      %324 = vadd.xlane.f32.xlu0 %v323
      %v325 = vpop.xlane.xlu0 %324
      %s326 = sld [smem:[#allocation5 + $0x2]]
      %v327 = vstv %s326
      %v328 = vadd.f32 %v325, %v327
      %vm329 = vcmp.eq.s32.totalorder %v152, 2
      %v330 = vsel %vm329, %v328, 0.0
      %v331 = vadd.f32 %v261, %v330
      %vm332 = vcmask 17408
      %v333 = vsel %vm332, %v331, -inf
      %334 = vmax.xlane.f32.xlu0 %v333
      %v335 = vpop.xlane.xlu0 %334
      %v336 = vsub.f32 %v331, %v335
      %v337 = vmul.f32 %v336, 1.442695
      %v338 = vpow.pop %v337
      %v339 = vsel %vm332, %v338, 0.0
      %340 = vadd.xlane.f32.xlu0 %v339
      %v341 = vpop.xlane.xlu0 %340
      %v342 = vrcp.pop %v341
      %v343 = vmul.f32 %v341, %v342
      %v344 = vsub.f32 1.0, %v343
      %v345 = vmul.f32 %v342, %v344
      %v346 = vadd.f32 %v342, %v345
      %vm347 = vweird.f32 %v341
      %vm348 = vweird.f32 %v342
      %vm349 = vmor %vm347, %vm348
      %v350 = vsel %vm349, %v342, %v346
      %v351 = vand.u32 2147483647, %v341
      %vm352 = vcmp.eq.f32.partialorder %v351, 8.507059e+37
      %v353 = vand.u32 %v341, 2147483648
      %v354 = vor.u32 1.1754944e-38, %v353
      %v355 = vsel %vm352, %v354, %v350
      %v356 = vmul.f32 %v338, %v355
      %357 = vst.msk [vmem:[#allocation8] sm:$0x3] %vm332, %v356
    $region65: #{tpu_custom_call.1} parent=1 // pred_fallthru
      _
    // Predicated region
    $region66: #{tpu_custom_call.1} parent=1 // pred_check
      _
    $region67: #{tpu_custom_call.1} parent=1 // pred_check_branch
      %359 = sbr.rel (0) target = $region69
    $region68: #{tpu_custom_call.1} parent=1 // pred_region
      %361 = vsyncadd [#allocation6], 0
      %s363 = sshll.u32 [#allocation8], 4
      %s364 = int_to_ptr.vmem [resolvable:$true] %s363
      %s365 = sshll.u32 %s13, 4
      %s366 = int_to_ptr.hbm [resolvable:$true] %s365
      %368 = dma.vmem_to_hbm [thread:$0]  %s364, 32, %s366, [#allocation6]
    $region69: #{tpu_custom_call.1} parent=1 // pred_fallthru
      _
    // Predicated region
    $region70: #{tpu_custom_call.1} parent=1 // pred_check
      _
    $region71: #{tpu_custom_call.1} parent=1 // pred_check_branch
      %370 = sbr.rel (0) target = $region73
    $region72: #{tpu_custom_call.1} parent=1 // pred_region
      %372 = dma.done [#allocation6], 32
    $region73: #{tpu_custom_call.1} parent=1 // pred_fallthru
      _
    %373 = vsyncpa [#allocation6], 1
    %374 = vsyncpa [#allocation7], 1

// kernel: tpu_custom_call.1
$region0: #{tpu_custom_call.1}
  #allocation0 [shape = 'u32[]', space=smem, size = 0x4, offset = 0x4, fixed_abs, tag = 'smem constant byte address 0x4 - core index']
  #allocation1 [shape = 'u32[72,128]{1,0:T(1,128)}', space=vmem, size = 0x9000, scoped, tag = 'internal scratch']
  #allocation2 [shape = 'f32[2,32]{1,0:T(2,128)}', space=vmem, size = 0x400, scoped, tag = 'scratch operand']
  #allocation3 [shape = 'f32[2,32]{1,0:T(2,128)}', space=vmem, size = 0x400, scoped, tag = 'scratch operand']
  #allocation4 [shape = 'f32[2,64]{1,0:T(2,128)}', space=vmem, size = 0x400, scoped, tag = 'scratch operand']
  %s0 = inlined_call_operand.vmem [shape: bf16[2,8,32], index: 0, kind: input, shape index: {}]
  %s1 = inlined_call_operand.vmem [shape: bf16[2,8,32], index: 1, kind: input, shape index: {}]
  %s2 = inlined_call_operand.vmem [shape: bf16[2,8,64], index: 2, kind: input, shape index: {}]
  %s3 = inlined_call_operand.vmem [shape: bf16[32,16], index: 3, kind: input, shape index: {}]
  %s4 = inlined_call_operand.vmem [shape: f32[1,16], index: 4, kind: input, shape index: {}]
  %s5 = inlined_call_operand.vmem [shape: f32[1,16], index: 5, kind: input, shape index: {}]
  %s6 = inlined_call_operand.vmem [shape: bf16[32,16], index: 6, kind: input, shape index: {}]
  %s7 = inlined_call_operand.vmem [shape: f32[1,16], index: 7, kind: input, shape index: {}]
  %s8 = inlined_call_operand.vmem [shape: f32[1,16], index: 8, kind: input, shape index: {}]
  %s9 = inlined_call_operand.vmem [shape: bf16[64,16], index: 9, kind: input, shape index: {}]
  %s10 = inlined_call_operand.vmem [shape: f32[1,16], index: 10, kind: input, shape index: {}]
  %s11 = inlined_call_operand.vmem [shape: f32[1,16], index: 11, kind: input, shape index: {}]
  %s12 = inlined_call_operand.vmem [shape: f32[3], index: 12, kind: input, shape index: {}]
  %s13 = inlined_call_operand.hbm [shape: f32[2,3], index: 13, kind: output, shape index: {}]
  %s14 = sld [smem:[#allocation0]]
  $region74: #{tpu_custom_call.1} parent=0
    _
  %s16 = ssub.s32 1, %s14
  %s17 = scalar_select 0, %s16, %s14
  $region1: #{tpu_custom_call.1} parent=0
    #allocation5 [shape = 'u8[512]{0}', space=smem, size = 0x200, scoped, tag = 'input window, operand 12, single buffered']
    #allocation6 [shape = 's32[1]{0}', space=sflag, size = 0x4, scoped, tag = 'scoped memory for tpu_custom_call.1']
    #allocation7 [shape = 's32[1]{0}', space=sflag, size = 0x4, scoped, tag = 'scoped memory for tpu_custom_call.1']
    #allocation8 [shape = 'u8[1024]{0}', space=vmem, size = 0x400, scoped, tag = 'output window, operand 0, single buffered']
    %18 = vsyncpa [#allocation7], 0
    %19 = vsyncpa [#allocation6], 0
    // Predicated region
    $region2: #{tpu_custom_call.1} parent=1 // pred_check
      _
    $region3: #{tpu_custom_call.1} parent=1 // pred_check_branch
      %21 = sbr.rel (0) target = $region5
    $region4: #{tpu_custom_call.1} parent=1 // pred_region
      _
    $region5: #{tpu_custom_call.1} parent=1 // pred_fallthru
      _
    // Predicated region
    $region6: #{tpu_custom_call.1} parent=1 // pred_check
      _
    $region7: #{tpu_custom_call.1} parent=1 // pred_check_branch
      %23 = sbr.rel (0) target = $region9
    $region8: #{tpu_custom_call.1} parent=1 // pred_region
      _
    $region9: #{tpu_custom_call.1} parent=1 // pred_fallthru
      _
    // Predicated region
    $region10: #{tpu_custom_call.1} parent=1 // pred_check
      _
    $region11: #{tpu_custom_call.1} parent=1 // pred_check_branch
      %25 = sbr.rel (0) target = $region13
    $region12: #{tpu_custom_call.1} parent=1 // pred_region
      _
    $region13: #{tpu_custom_call.1} parent=1 // pred_fallthru
      _
    // Predicated region
    $region14: #{tpu_custom_call.1} parent=1 // pred_check
      _
    $region15: #{tpu_custom_call.1} parent=1 // pred_check_branch
      %27 = sbr.rel (0) target = $region17
    $region16: #{tpu_custom_call.1} parent=1 // pred_region
      _
    $region17: #{tpu_custom_call.1} parent=1 // pred_fallthru
      _
    // Predicated region
    $region18: #{tpu_custom_call.1} parent=1 // pred_check
      _
    $region19: #{tpu_custom_call.1} parent=1 // pred_check_branch
      %29 = sbr.rel (0) target = $region21
    $region20: #{tpu_custom_call.1} parent=1 // pred_region
      _
    $region21: #{tpu_custom_call.1} parent=1 // pred_fallthru
      _
    // Predicated region
    $region22: #{tpu_custom_call.1} parent=1 // pred_check
      _
    $region23: #{tpu_custom_call.1} parent=1 // pred_check_branch
      %31 = sbr.rel (0) target = $region25
    $region24: #{tpu_custom_call.1} parent=1 // pred_region
      _
    $region25: #{tpu_custom_call.1} parent=1 // pred_fallthru
      _
    // Predicated region
    $region26: #{tpu_custom_call.1} parent=1 // pred_check
      _
    $region27: #{tpu_custom_call.1} parent=1 // pred_check_branch
      %33 = sbr.rel (0) target = $region29
    $region28: #{tpu_custom_call.1} parent=1 // pred_region
      _
    $region29: #{tpu_custom_call.1} parent=1 // pred_fallthru
      _
    // Predicated region
    $region30: #{tpu_custom_call.1} parent=1 // pred_check
      _
    $region31: #{tpu_custom_call.1} parent=1 // pred_check_branch
      %35 = sbr.rel (0) target = $region33
    $region32: #{tpu_custom_call.1} parent=1 // pred_region
      _
    $region33: #{tpu_custom_call.1} parent=1 // pred_fallthru
      _
    // Predicated region
    $region34: #{tpu_custom_call.1} parent=1 // pred_check
      _
    $region35: #{tpu_custom_call.1} parent=1 // pred_check_branch
      %37 = sbr.rel (0) target = $region37
    $region36: #{tpu_custom_call.1} parent=1 // pred_region
      _
    $region37: #{tpu_custom_call.1} parent=1 // pred_fallthru
      _
    // Predicated region
    $region38: #{tpu_custom_call.1} parent=1 // pred_check
      _
    $region39: #{tpu_custom_call.1} parent=1 // pred_check_branch
      %39 = sbr.rel (0) target = $region41
    $region40: #{tpu_custom_call.1} parent=1 // pred_region
      _
    $region41: #{tpu_custom_call.1} parent=1 // pred_fallthru
      _
    // Predicated region
    $region42: #{tpu_custom_call.1} parent=1 // pred_check
      _
    $region43: #{tpu_custom_call.1} parent=1 // pred_check_branch
      %41 = sbr.rel (0) target = $region45
    $region44: #{tpu_custom_call.1} parent=1 // pred_region
      _
    $region45: #{tpu_custom_call.1} parent=1 // pred_fallthru
      _
    // Predicated region
    $region46: #{tpu_custom_call.1} parent=1 // pred_check
      _
    $region47: #{tpu_custom_call.1} parent=1 // pred_check_branch
      %43 = sbr.rel (0) target = $region49
    $region48: #{tpu_custom_call.1} parent=1 // pred_region
      _
    $region49: #{tpu_custom_call.1} parent=1 // pred_fallthru
      _
    // Predicated region
    $region50: #{tpu_custom_call.1} parent=1 // pred_check
      _
    $region51: #{tpu_custom_call.1} parent=1 // pred_check_branch
      %45 = sbr.rel (0) target = $region53
    $region52: #{tpu_custom_call.1} parent=1 // pred_region
      %47 = vsyncadd [#allocation7], 0
      %s49 = sshll.u32 %s12, 4
      %s50 = int_to_ptr.vmem [resolvable:$true] %s49
      %52 = dma.vmem_to_smem %s50, 16, [#allocation5], [#allocation7]
    $region53: #{tpu_custom_call.1} parent=1 // pred_fallthru
      _
    // Predicated region
    $region54: #{tpu_custom_call.1} parent=1 // pred_check
      _
    $region55: #{tpu_custom_call.1} parent=1 // pred_check_branch
      %54 = sbr.rel (0) target = $region57
    $region56: #{tpu_custom_call.1} parent=1 // pred_region
      %56 = dma.done [#allocation7], 16
    $region57: #{tpu_custom_call.1} parent=1 // pred_fallthru
      _
    %57 = sfence
    %p59 = scmp.eq.s32.totalorder 0, 0
    // Predicated region
    $region58: #{tpu_custom_call.1} parent=1 // pred_check
      %p60 = pneg %p59
    $region59: #{tpu_custom_call.1} parent=1 // pred_check_branch
      %62 = sbr.rel (%p60) target = $region61
    $region60: #{tpu_custom_call.1} parent=1 // pred_region
      %vm63 = vcmask 254976
      %64 = vst.msk [vmem:[#allocation2] sm:$0x3] %vm63, 0.0
      %65 = vst.msk [vmem:[#allocation3] sm:$0x3] %vm63, 0.0
      %vm66 = vcmask 517120
      %67 = vst.msk [vmem:[#allocation4] sm:$0x3] %vm66, 0.0
    $region61: #{tpu_custom_call.1} parent=1 // pred_fallthru
      _
    %v68 = vld [vmem:[%s0] sm:$0xf]
    %v69 = vld [vmem:[%s0 + $0x4] sm:$0xf]
    %v70 = vunpack.c.l.bf16 %v68
    %v71 = vunpack.c.l.bf16 %v69
    %vm72 = vcmask 261120
    %v73 = vsel %vm72, %v70, 0.0
    %v74 = vrot.slane %v73, 4
    %v75 = vadd.f32 %v73, %v74
    %v76 = vrot.slane %v75, 2
    %v77 = vadd.f32 %v75, %v76
    %v78 = vrot.slane %v77, 1
    %v79 = vadd.f32 %v77, %v78
    %v80 = vsel %vm72, %v71, 0.0
    %v81 = vrot.slane %v80, 4
    %v82 = vadd.f32 %v80, %v81
    %v83 = vrot.slane %v82, 2
    %v84 = vadd.f32 %v82, %v83
    %v85 = vrot.slane %v84, 1
    %v86 = vadd.f32 %v84, %v85
    %v87 = vld [vmem:[#allocation2] sm:$0x3]
    %vm90 = vcmask 1041409
    %v91 = vsel %vm90, %v86, %v79
    %v93 = vadd.f32 %v87, %v91
    %vm94 = vcmask 254976
    %95 = vst.msk [vmem:[#allocation2] sm:$0x3] %vm94, %v93
    %v96 = vld [vmem:[%s1] sm:$0xf]
    %v97 = vld [vmem:[%s1 + $0x4] sm:$0xf]
    %v98 = vunpack.c.l.bf16 %v96
    %v99 = vunpack.c.l.bf16 %v97
    %v100 = vsel %vm72, %v98, 0.0
    %v101 = vrot.slane %v100, 4
    %v102 = vadd.f32 %v100, %v101
    %v103 = vrot.slane %v102, 2
    %v104 = vadd.f32 %v102, %v103
    %v105 = vrot.slane %v104, 1
    %v106 = vadd.f32 %v104, %v105
    %v107 = vsel %vm72, %v99, 0.0
    %v108 = vrot.slane %v107, 4
    %v109 = vadd.f32 %v107, %v108
    %v110 = vrot.slane %v109, 2
    %v111 = vadd.f32 %v109, %v110
    %v112 = vrot.slane %v111, 1
    %v113 = vadd.f32 %v111, %v112
    %v114 = vld [vmem:[#allocation3] sm:$0x3]
    %v117 = vsel %vm90, %v113, %v106
    %v119 = vadd.f32 %v114, %v117
    %120 = vst.msk [vmem:[#allocation3] sm:$0x3] %vm94, %v119
    %v121 = vld [vmem:[%s2] sm:$0xf]
    %v122 = vld [vmem:[%s2 + $0x4] sm:$0xf]
    %v123 = vunpack.c.l.bf16 %v121
    %v124 = vunpack.c.l.bf16 %v122
    %vm125 = vcmask 523264
    %v126 = vsel %vm125, %v123, 0.0
    %v127 = vrot.slane %v126, 4
    %v128 = vadd.f32 %v126, %v127
    %v129 = vrot.slane %v128, 2
    %v130 = vadd.f32 %v128, %v129
    %v131 = vrot.slane %v130, 1
    %v132 = vadd.f32 %v130, %v131
    %v133 = vsel %vm125, %v124, 0.0
    %v134 = vrot.slane %v133, 4
    %v135 = vadd.f32 %v133, %v134
    %v136 = vrot.slane %v135, 2
    %v137 = vadd.f32 %v135, %v136
    %v138 = vrot.slane %v137, 1
    %v139 = vadd.f32 %v137, %v138
    %v140 = vld [vmem:[#allocation4] sm:$0x3]
    %v143 = vsel %vm90, %v139, %v132
    %v145 = vadd.f32 %v140, %v143
    %vm146 = vcmask 517120
    %147 = vst.msk [vmem:[#allocation4] sm:$0x3] %vm146, %v145
    // Predicated region
    $region62: #{tpu_custom_call.1} parent=1 // pred_check
      %p148 = pneg %p59
    $region63: #{tpu_custom_call.1} parent=1 // pred_check_branch
      %150 = sbr.rel (%p148) target = $region65
    $region64: #{tpu_custom_call.1} parent=1 // pred_region
      %v151 = vlaneseq
      %v152 = vand.u32 %v151, 127
      %v153 = vld [vmem:[%s4] sm:$0x1]
      %v154 = vld [vmem:[%s5] sm:$0x1]
      %v155 = vld [vmem:[%s3] sm:$0xf]
      %v156 = vld [vmem:[%s3 + $0x4] sm:$0xf]
      %v157 = vld [vmem:[%s3 + $0x8] sm:$0xf]
      %v158 = vld [vmem:[%s3 + $0xc] sm:$0xf]
      %v159 = vld [vmem:[#allocation2] sm:$0x3]
      %v160 = vmul.f32 %v159, 0.125
      %v161 = vpack.c.bf16 %v160, %v160
      %v163 = vperm.slane %v153, 0
      %v169 = vunpack.c.l.b16 %v155
      %v170 = vunpack.c.l.b16 %v156
      %v171 = vunpack.c.l.b16 %v157
      %v172 = vunpack.c.l.b16 %v158
      %v173 = vpack.c.b16 %v170, %v169
      %v174 = vpack.c.b16 %v172, %v171
      %v178 = vsel %vm72, %v161, 0
      %180 = vmatpush.bf16.msra.mxu0 0
      %181 = vmatpush.bf16.msra.mxu0 0
      %182 = vmatpush.bf16.msra.mxu0 0
      %183 = vmatpush.bf16.msra.mxu0 0
      %184 = vmatpush.bf16.msra.mxu0 0
      %185 = vmatpush.bf16.msra.mxu0 0
      %186 = vmatpush.bf16.msra.mxu0 %v174
      %187 = vmatpush.bf16.msra.mxu0 %v173
      %188 = vmatmul.bf16.gmra.mxu0 %v178
      %v189 = vpop.f32.mrf.mxu0
      %v190 = vadd.f32 %v163, %v189
      %v191 = vpop.f32.mrf.mxu0
      %192 = vdwg.mxu0
      %v193 = vmax.f32 %v190, 0.0
      %v195 = vperm.slane %v154, 0
      %v197 = vmul.f32 %v193, %v195
      %vm198 = vcmask 123904
      %v199 = vsel %vm198, %v197, 0.0
      %200 = vadd.xlane.f32.xlu0 %v199
      %v201 = vpop.xlane.xlu0 %200
      %s202 = sld [smem:[#allocation5]]
      %v203 = vstv %s202
      %v204 = vadd.f32 %v201, %v203
      %vm205 = vcmp.eq.s32.totalorder %v152, 0
      %v206 = vsel %vm205, %v204, 0.0
      %v207 = vadd.f32 %v206, 0.0
      %v208 = vld [vmem:[%s7] sm:$0x1]
      %v209 = vld [vmem:[%s8] sm:$0x1]
      %v210 = vld [vmem:[%s6] sm:$0xf]
      %v211 = vld [vmem:[%s6 + $0x4] sm:$0xf]
      %v212 = vld [vmem:[%s6 + $0x8] sm:$0xf]
      %v213 = vld [vmem:[%s6 + $0xc] sm:$0xf]
      %v214 = vld [vmem:[#allocation3] sm:$0x3]
      %v215 = vmul.f32 %v214, 0.125
      %v216 = vpack.c.bf16 %v215, %v215
      %v218 = vperm.slane %v208, 0
      %v224 = vunpack.c.l.b16 %v210
      %v225 = vunpack.c.l.b16 %v211
      %v226 = vunpack.c.l.b16 %v212
      %v227 = vunpack.c.l.b16 %v213
      %v228 = vpack.c.b16 %v225, %v224
      %v229 = vpack.c.b16 %v227, %v226
      %v233 = vsel %vm72, %v216, 0
      %235 = vmatpush.bf16.msra.mxu0 0
      %236 = vmatpush.bf16.msra.mxu0 0
      %237 = vmatpush.bf16.msra.mxu0 0
      %238 = vmatpush.bf16.msra.mxu0 0
      %239 = vmatpush.bf16.msra.mxu0 0
      %240 = vmatpush.bf16.msra.mxu0 0
      %241 = vmatpush.bf16.msra.mxu0 %v229
      %242 = vmatpush.bf16.msra.mxu0 %v228
      %243 = vmatmul.bf16.gmra.mxu0 %v233
      %v244 = vpop.f32.mrf.mxu0
      %v245 = vadd.f32 %v218, %v244
      %v246 = vpop.f32.mrf.mxu0
      %247 = vdwg.mxu0
      %v248 = vmax.f32 %v245, 0.0
      %v250 = vperm.slane %v209, 0
      %v252 = vmul.f32 %v248, %v250
      %v253 = vsel %vm198, %v252, 0.0
      %254 = vadd.xlane.f32.xlu0 %v253
      %v255 = vpop.xlane.xlu0 %254
      %s256 = sld [smem:[#allocation5 + $0x1]]
      %v257 = vstv %s256
      %v258 = vadd.f32 %v255, %v257
      %vm259 = vcmp.eq.s32.totalorder %v152, 1
      %v260 = vsel %vm259, %v258, 0.0
      %v261 = vadd.f32 %v207, %v260
      %v262 = vld [vmem:[%s10] sm:$0x1]
      %v263 = vld [vmem:[%s11] sm:$0x1]
      %v264 = vld [vmem:[%s9] sm:$0xf]
      %v265 = vld [vmem:[%s9 + $0x4] sm:$0xf]
      %v266 = vld [vmem:[%s9 + $0x8] sm:$0xf]
      %v267 = vld [vmem:[%s9 + $0xc] sm:$0xf]
      %v268 = vld [vmem:[%s9 + $0x10] sm:$0xf]
      %v269 = vld [vmem:[%s9 + $0x14] sm:$0xf]
      %v270 = vld [vmem:[%s9 + $0x18] sm:$0xf]
      %v271 = vld [vmem:[%s9 + $0x1c] sm:$0xf]
      %v272 = vld [vmem:[#allocation4] sm:$0x3]
      %v273 = vmul.f32 %v272, 0.125
      %v274 = vpack.c.bf16 %v273, %v273
      %v276 = vperm.slane %v262, 0
      %v286 = vunpack.c.l.b16 %v264
      %v287 = vunpack.c.l.b16 %v265
      %v288 = vunpack.c.l.b16 %v266
      %v289 = vunpack.c.l.b16 %v267
      %v290 = vunpack.c.l.b16 %v268
      %v291 = vunpack.c.l.b16 %v269
      %v292 = vunpack.c.l.b16 %v270
      %v293 = vunpack.c.l.b16 %v271
      %v294 = vpack.c.b16 %v287, %v286
      %v295 = vpack.c.b16 %v289, %v288
      %v296 = vpack.c.b16 %v291, %v290
      %v297 = vpack.c.b16 %v293, %v292
      %v303 = vsel %vm125, %v274, 0
      %305 = vmatpush.bf16.msra.mxu0 0
      %306 = vmatpush.bf16.msra.mxu0 0
      %307 = vmatpush.bf16.msra.mxu0 0
      %308 = vmatpush.bf16.msra.mxu0 0
      %309 = vmatpush.bf16.msra.mxu0 %v297
      %310 = vmatpush.bf16.msra.mxu0 %v296
      %311 = vmatpush.bf16.msra.mxu0 %v295
      %312 = vmatpush.bf16.msra.mxu0 %v294
      %313 = vmatmul.bf16.gmra.mxu0 %v303
      %v314 = vpop.f32.mrf.mxu0
      %v315 = vadd.f32 %v276, %v314
      %v316 = vpop.f32.mrf.mxu0
      %317 = vdwg.mxu0
      %v318 = vmax.f32 %v315, 0.0
      %v320 = vperm.slane %v263, 0
      %v322 = vmul.f32 %v318, %v320
      %v323 = vsel %vm198, %v322, 0.0
      %324 = vadd.xlane.f32.xlu0 %v323
      %v325 = vpop.xlane.xlu0 %324
      %s326 = sld [smem:[#allocation5 + $0x2]]
      %v327 = vstv %s326
      %v328 = vadd.f32 %v325, %v327
      %vm329 = vcmp.eq.s32.totalorder %v152, 2
      %v330 = vsel %vm329, %v328, 0.0
      %v331 = vadd.f32 %v261, %v330
      %vm332 = vcmask 17408
      %v333 = vsel %vm332, %v331, -inf
      %334 = vmax.xlane.f32.xlu0 %v333
      %v335 = vpop.xlane.xlu0 %334
      %v336 = vsub.f32 %v331, %v335
      %v337 = vmul.f32 %v336, 1.442695
      %v338 = vpow.pop %v337
      %v339 = vsel %vm332, %v338, 0.0
      %340 = vadd.xlane.f32.xlu0 %v339
      %v341 = vpop.xlane.xlu0 %340
      %v342 = vrcp.pop %v341
      %v343 = vmul.f32 %v341, %v342
      %v344 = vsub.f32 1.0, %v343
      %v345 = vmul.f32 %v342, %v344
      %v346 = vadd.f32 %v342, %v345
      %vm347 = vweird.f32 %v341
      %vm348 = vweird.f32 %v342
      %vm349 = vmor %vm347, %vm348
      %v350 = vsel %vm349, %v342, %v346
      %v351 = vand.u32 2147483647, %v341
      %vm352 = vcmp.eq.f32.partialorder %v351, 8.507059e+37
      %v353 = vand.u32 %v341, 2147483648
      %v354 = vor.u32 1.1754944e-38, %v353
      %v355 = vsel %vm352, %v354, %v350
      %v356 = vmul.f32 %v338, %v355
      %357 = vst.msk [vmem:[#allocation8] sm:$0x3] %vm332, %v356
    $region65: #{tpu_custom_call.1} parent=1 // pred_fallthru
      _
    // Predicated region
    $region66: #{tpu_custom_call.1} parent=1 // pred_check
      _
    $region67: #{tpu_custom_call.1} parent=1 // pred_check_branch
      %359 = sbr.rel (0) target = $region69
    $region68: #{tpu_custom_call.1} parent=1 // pred_region
      %361 = vsyncadd [#allocation6], 0
      %s363 = sshll.u32 [#allocation8], 4
      %s364 = int_to_ptr.vmem [resolvable:$true] %s363
      %s365 = sshll.u32 %s13, 4
      %s366 = int_to_ptr.hbm [resolvable:$true] %s365
      %368 = dma.vmem_to_hbm [thread:$0]  %s364, 32, %s366, [#allocation6]
    $region69: #{tpu_custom_call.1} parent=1 // pred_fallthru
      _
    // Predicated region
    $region70: #{tpu_custom_call.1} parent=1 // pred_check
      _
    $region71: #{tpu_custom_call.1} parent=1 // pred_check_branch
      %370 = sbr.rel (0) target = $region73
    $region72: #{tpu_custom_call.1} parent=1 // pred_region
      %372 = dma.done [#allocation6], 32
    $region73: #{tpu_custom_call.1} parent=1 // pred_fallthru
      _
    %373 = vsyncpa [#allocation6], 1
    %374 = vsyncpa [#allocation7], 1

</llo_original>
